<compile_context>
chip_gen: v7x
topology: tpu7x:2x2x1
jax: 0.10.0
libtpu: 0.0.40
codegen_flags: <defaults>
</compile_context>

<pallas_src>
import jax
import jax.numpy as jnp
from jax.experimental import pallas as pl
from jax.experimental.pallas import tpu as pltpu


def make_lstm_kernel(*, Bp, T, Tc, NC, W, Hp, Cp, unroll):
    Gp = 4 * Hp
    CHUNK_ROWS = Tc * Bp
    Tp = NC * Tc

    def _aligned(v, m):
        # pl.multiple_of only for traced values; python ints pass through.
        return v if isinstance(v, int) else pl.multiple_of(v, m)

    def kernel(x_hbm, wih_ref, whh_ref, b_ref, wfc_ref, bfc_ref,
               out_ref, seq_buf, zin_buf, x_sem):
        layer = pl.program_id(0)

        # Layer 0: DMA the (time-major, padded, bf16) input sequence from HBM
        # into the persistent VMEM sequence scratch once.
        @pl.when(layer == 0)
        def _():
            cp = pltpu.make_async_copy(x_hbm, seq_buf, x_sem)
            cp.start()
            cp.wait()

        wih_t = wih_ref[0]          # (W,  4Hp) bf16, pre-transposed + padded
        whh_t = whh_ref[0]          # (Hp, 4Hp) bf16
        bias = b_ref[0]             # (1,  4Hp) f32 = b_ih + b_hh (reordered)

        def project(ci, slot):
            # Hoisted input projection for one time chunk: one MXU matmul,
            # bias folded in, result stored into the Z_in double buffer.
            src = _aligned(ci * CHUNK_ROWS, CHUNK_ROWS)
            dst = _aligned(slot * CHUNK_ROWS, CHUNK_ROWS)
            xc = seq_buf[pl.ds(src, CHUNK_ROWS), :]               # bf16
            zin_buf[pl.ds(dst, CHUNK_ROWS), :] = (
                jnp.dot(xc, wih_t, preferred_element_type=jnp.float32) + bias)

        def run_chunk(ci, slot, h, c):
            zbase = slot * CHUNK_ROWS
            sbase = ci * CHUNK_ROWS

            def step(tt, carry):
                h, c = carry                                       # (Bp, Hp) f32
                zr = _aligned(zbase + tt * Bp, Bp)
                # Only the small recurrent matmul stays on the serial path.
                z = zin_buf[pl.ds(zr, Bp), :] + jnp.dot(
                    h.astype(jnp.bfloat16), whh_t,
                    preferred_element_type=jnp.float32)            # (Bp, 4Hp)
                # Gate layout (i, f, o, g), each gate padded to Hp lanes:
                # sigmoid on one contiguous [0:3Hp] slab, tanh on [3Hp:4Hp].
                # All slices are 128-lane aligned -> no masked/XLU lane work.
                sig = jax.nn.sigmoid(z[:, :3 * Hp])
                i_g = sig[:, 0:Hp]
                f_g = sig[:, Hp:2 * Hp]
                o_g = sig[:, 2 * Hp:3 * Hp]
                g_g = jnp.tanh(z[:, 3 * Hp:])
                c_new = f_g * c + i_g * g_g
                h_new = o_g * jnp.tanh(c_new)
                # Padded hidden columns [H:Hp] stay exactly 0 (zero weights and
                # bias -> 0.5*c_pad + 0.5*0 with c_pad starting at 0).
                if Tp != T:
                    valid = (ci * Tc + tt) < T
                    h_new = jnp.where(valid, h_new, h)
                    c_new = jnp.where(valid, c_new, c)
                # Lane-dense (128-aligned) write-back of the hidden state.
                sr = _aligned(sbase + tt * Bp, Bp)
                seq_buf[pl.ds(sr, Bp), pl.ds(0, Hp)] = h_new.astype(jnp.bfloat16)
                return h_new, c_new

            return jax.lax.fori_loop(0, Tc, step, (h, c), unroll=unroll)

        h0 = jnp.zeros((Bp, Hp), jnp.float32)
        c0 = jnp.zeros((Bp, Hp), jnp.float32)

        if NC == 1:
            project(0, 0)
            h_last, _ = run_chunk(0, 0, h0, c0)
        else:
            project(0, 0)

            def chunk_body(ci, carry):
                h, c = carry
                # Issue next chunk's projection before the serial recurrence of
                # this chunk so the MXU work can hide under it.
                @pl.when(ci + 1 < NC)
                def _():
                    project(ci + 1, (ci + 1) & 1)
                return run_chunk(ci, ci & 1, h, c)

            h_last, _ = jax.lax.fori_loop(0, NC, chunk_body, (h0, c0))

        # Note: padded batch rows [B:Bp] of h carry nonzero (but finite) junk;
        # they only feed zero-weight / sliced-off paths.
        @pl.when(layer == pl.num_programs(0) - 1)
        def _():
            out_ref[...] = (jnp.dot(h_last, wfc_ref[...],
                                    preferred_element_type=jnp.float32)
                            + bfc_ref[...])

    return kernel


def rnn_forward_pallas(x, params, *, hidden_size, num_layers, num_classes):
    """x: (B, T, input_size) float32 -> (B, num_classes) float32."""
    B, T, D = x.shape
    H = hidden_size
    L = num_layers
    C = num_classes

    def rup(v, m):
        return ((v + m - 1) // m) * m

    Hp = rup(H, 128)                 # per-gate lane padding (lane-dense slices)
    Gp = 4 * Hp
    Dp = rup(D, 128)
    W = max(Dp, Hp)                  # sequence-buffer feature width
    Bp = rup(B, 16)                  # bf16 packs sublanes in pairs -> pad to 16
    Cp = rup(C, 128)                 # lane-dense fc output

    # Time chunking of the hoisted input projection (bounds Z_in VMEM and lets
    # chunk c+1's projection overlap chunk c's recurrence).
    zin_slot_budget = 2 << 20        # ~2 MiB per Z_in slot
    Tc = max(1, min(T, zin_slot_budget // (Bp * Gp * 4)))
    NC = (T + Tc - 1) // Tc
    Tp = NC * Tc
    NBUF = 1 if NC == 1 else 2

    # --- glue (plain JAX): pad, transpose to time-major, flatten, cast bf16 ---
    x_tm = jnp.transpose(x.astype(jnp.float32), (1, 0, 2))            # (T, B, D)
    x_tm = jnp.pad(x_tm, ((0, Tp - T), (0, Bp - B), (0, W - D)))      # (Tp,Bp,W)
    x2d = x_tm.reshape(Tp * Bp, W).astype(jnp.bfloat16)               # (Tp*Bp,W)

    # Weight packing: gates reordered torch (i,f,g,o) -> (i,f,o,g), each gate
    # padded to Hp output columns; input rows padded to W (zeros).
    wih_t_all = jnp.zeros((L, W, Gp), jnp.float32)
    whh_t_all = jnp.zeros((L, Hp, Gp), jnp.float32)
    b_all = jnp.zeros((L, 1, Gp), jnp.float32)
    GATE_SRC = (0, 1, 3, 2)          # dest blocks i,f,o,g <- torch i,f,g,o
    for l in range(L):
        w_ih, w_hh, b_ih, b_hh = params["lstm"][l]                    # torch shapes
        in_l = w_ih.shape[1]                                          # D or H
        for gd, gs in enumerate(GATE_SRC):
            s = slice(gs * H, (gs + 1) * H)
            col = slice(gd * Hp, gd * Hp + H)
            wih_t_all = wih_t_all.at[l, :in_l, col].set(w_ih[s].T)
            whh_t_all = whh_t_all.at[l, :H, col].set(w_hh[s].T)
            b_all = b_all.at[l, 0, col].set(b_ih[s] + b_hh[s])
    wih_t_all = wih_t_all.astype(jnp.bfloat16)                        # MXU bf16
    whh_t_all = whh_t_all.astype(jnp.bfloat16)

    wfc_t = jnp.zeros((Hp, Cp), jnp.float32).at[:H, :C].set(
        params["fc_w"].T.astype(jnp.float32))
    bfc = jnp.zeros((1, Cp), jnp.float32).at[0, :C].set(
        params["fc_b"].astype(jnp.float32))

    unroll = True if T <= 16 else 8
    kernel = make_lstm_kernel(Bp=Bp, T=T, Tc=Tc, NC=NC, W=W, Hp=Hp, Cp=Cp,
                              unroll=unroll)

    # Generation-aware VMEM budget (bf16 sequence + chunked Z_in + weights).
    seq_bytes = Tp * Bp * W * 2
    zin_bytes = NBUF * Tc * Bp * Gp * 4
    w_bytes = 2 * (W * Gp * 2 + Hp * Gp * 2 + Gp * 4 + Hp * Cp * 4 + Cp * 4)
    out_bytes = 2 * Bp * Cp * 4
    need = seq_bytes + zin_bytes + w_bytes + out_bytes + (2 << 20)
    try:
        cap = int(getattr(pltpu.get_tpu_info(), "vmem_capacity_bytes", 128 << 20))
    except Exception:
        cap = 128 << 20
    vmem_limit = int(max(16 << 20, min(need, int(cap * 0.90))))

    out = pl.pallas_call(
        kernel,
        out_shape=jax.ShapeDtypeStruct((Bp, Cp), jnp.float32),
        grid_spec=pltpu.PrefetchScalarGridSpec(
            num_scalar_prefetch=0,
            grid=(L,),
            in_specs=[
                pl.BlockSpec(memory_space=pl.ANY),                  # x (HBM)
                pl.BlockSpec((1, W, Gp), lambda l: (l, 0, 0)),      # W_ih^T / layer
                pl.BlockSpec((1, Hp, Gp), lambda l: (l, 0, 0)),     # W_hh^T / layer
                pl.BlockSpec((1, 1, Gp), lambda l: (l, 0, 0)),      # bias / layer
                pl.BlockSpec((Hp, Cp), lambda l: (0, 0)),           # fc weight^T
                pl.BlockSpec((1, Cp), lambda l: (0, 0)),            # fc bias
            ],
            out_specs=pl.BlockSpec((Bp, Cp), lambda l: (0, 0)),
            scratch_shapes=[
                pltpu.VMEM((Tp * Bp, W), jnp.bfloat16),     # sequence buffer
                pltpu.VMEM((NBUF * Tc * Bp, Gp), jnp.float32),  # chunked Z_in
                pltpu.SemaphoreType.DMA(()),                # x DMA semaphore
            ],
        ),
        compiler_params=pltpu.CompilerParams(
            dimension_semantics=("arbitrary",),
            vmem_limit_bytes=vmem_limit),
    )(x2d, wih_t_all, whh_t_all, b_all, wfc_t, bfc)
    return out[:B, :C]


# ----------------------------- pure-JAX reference ---------------------------
def rnn_forward_ref(x, params, *, hidden_size, num_layers, num_classes):
    B, T, D = x.shape
    H = hidden_size
    seq = x
    for l in range(num_layers):
        w_ih, w_hh, b_ih, b_hh = params["lstm"][l]
        h = jnp.zeros((B, H), jnp.float32)
        c = jnp.zeros((B, H), jnp.float32)
        outs = []
        for t in range(T):
            z = seq[:, t, :] @ w_ih.T + b_ih + h @ w_hh.T + b_hh
            i_g = jax.nn.sigmoid(z[:, 0:H])
            f_g = jax.nn.sigmoid(z[:, H:2 * H])
            g_g = jnp.tanh(z[:, 2 * H:3 * H])
            o_g = jax.nn.sigmoid(z[:, 3 * H:4 * H])
            c = f_g * c + i_g * g_g
            h = o_g * jnp.tanh(c)
            outs.append(h)
        seq = jnp.stack(outs, axis=1)
    return h @ params["fc_w"].T + params["fc_b"]


# ----------------------------- parameter init -------------------------------
def init_params(key, input_size, hidden_size, num_layers, num_classes):
    H = hidden_size
    bound = 1.0 / jnp.sqrt(jnp.float32(H))
    params = {"lstm": []}
    for l in range(num_layers):
        in_l = input_size if l == 0 else H
        key, k1, k2, k3, k4 = jax.random.split(key, 5)
        w_ih = jax.random.uniform(k1, (4 * H, in_l), jnp.float32, -bound, bound)
        w_hh = jax.random.uniform(k2, (4 * H, H), jnp.float32, -bound, bound)
        b_ih = jax.random.uniform(k3, (4 * H,), jnp.float32, -bound, bound)
        b_hh = jax.random.uniform(k4, (4 * H,), jnp.float32, -bound, bound)
        params["lstm"].append((w_ih, w_hh, b_ih, b_hh))
    key, k5, k6 = jax.random.split(key, 3)
    fb = 1.0 / jnp.sqrt(jnp.float32(H))
    params["fc_w"] = jax.random.uniform(k5, (num_classes, H), jnp.float32, -fb, fb)
    params["fc_b"] = jax.random.uniform(k6, (num_classes,), jnp.float32, -fb, fb)
    return params


if __name__ == "__main__":
    B, T = 2, 8
    input_size, hidden_size, num_layers, num_classes = 16, 32, 2, 10

    key = jax.random.PRNGKey(0)
    key, kx = jax.random.split(key)
    x = jax.random.normal(kx, (B, T, input_size), jnp.float32)
    params = init_params(key, input_size, hidden_size, num_layers, num_classes)

    out = rnn_forward_pallas(
        x, params, hidden_size=hidden_size, num_layers=num_layers,
        num_classes=num_classes)
    out = jax.block_until_ready(out)

    ref = rnn_forward_ref(
        x, params, hidden_size=hidden_size, num_layers=num_layers,
        num_classes=num_classes)
    assert out.shape == (B, num_classes)
    # Tolerance accounts for bf16 MXU matmuls (gate math stays f32).
    assert jnp.allclose(out, ref, atol=5e-2, rtol=5e-2), (out, ref)

    print("KERNEL_OK")
</pallas_src>

<mosaic_0001>
module attributes {stable_mosaic.version = 11 : i64} {
  func.func @kernel(%arg0: i32, %arg1: memref<128x128xbf16, #tpu.memory_space<any>>, %arg2: memref<1x128x512xbf16, #tpu.memory_space<vmem>>, %arg3: memref<1x128x512xbf16, #tpu.memory_space<vmem>>, %arg4: memref<1x1x512xf32, #tpu.memory_space<vmem>>, %arg5: memref<128x128xf32, #tpu.memory_space<vmem>>, %arg6: memref<1x128xf32, #tpu.memory_space<vmem>>, %arg7: memref<16x128xf32, #tpu.memory_space<vmem>>, %arg8: memref<128x128xbf16, #tpu.memory_space<vmem>>, %arg9: memref<128x512xf32, #tpu.memory_space<vmem>>, %arg10: memref<!tpu.dma_semaphore, #tpu.memory_space<semaphore_mem>>) attributes {dimension_semantics = [#tpu.dimension_semantics<arbitrary>], iteration_bounds = array<i64: 2>, scalar_prefetch = 0 : i64, scratch_operands = 3 : i64, tpu.core_type = #tpu.core_type<tc>, window_params = [{}, {transform_indices = @transform_1, window_bounds = array<i64: 1, 128, 512>}, {transform_indices = @transform_2, window_bounds = array<i64: 1, 128, 512>}, {transform_indices = @transform_3, window_bounds = array<i64: 1, 1, 512>}, {pipeline_mode = #tpu.pipeline_mode<synchronous>, transform_indices = @transform_4, window_bounds = array<i64: 128, 128>}, {pipeline_mode = #tpu.pipeline_mode<synchronous>, transform_indices = @transform_5, window_bounds = array<i64: 1, 128>}, {pipeline_mode = #tpu.pipeline_mode<synchronous>, transform_indices = @transform_6, window_bounds = array<i64: 16, 128>}]} {
    %c0_i32 = arith.constant 0 : i32
    %0 = arith.cmpi eq, %arg0, %c0_i32 : i32
    %1 = arith.extui %0 : i1 to i32
    %c0_i32_0 = arith.constant 0 : i32
    %2 = arith.cmpi ne, %1, %c0_i32_0 : i32
    scf.if %2 {
      tpu.enqueue_dma source(%arg1 : memref<128x128xbf16, #tpu.memory_space<any>>) target(%arg8 : memref<128x128xbf16, #tpu.memory_space<vmem>>) target_semaphore(%arg10 : memref<!tpu.dma_semaphore, #tpu.memory_space<semaphore_mem>>)
      tpu.wait_dma2 semaphore(%arg10 : memref<!tpu.dma_semaphore, #tpu.memory_space<semaphore_mem>>) src(%arg1 : memref<128x128xbf16, #tpu.memory_space<any>>) dst(%arg8 : memref<128x128xbf16, #tpu.memory_space<vmem>>)
    } else {
    }
    %c0 = arith.constant 0 : index
    %c0_1 = arith.constant 0 : index
    %c0_2 = arith.constant 0 : index
    %3 = vector.load %arg2[%c0, %c0_1, %c0_2] : memref<1x128x512xbf16, #tpu.memory_space<vmem>>, vector<1x128x512xbf16>
    %4 = vector.shape_cast %3 : vector<1x128x512xbf16> to vector<128x512xbf16>
    %c0_3 = arith.constant 0 : index
    %c0_4 = arith.constant 0 : index
    %c0_5 = arith.constant 0 : index
    %5 = vector.load %arg3[%c0_3, %c0_4, %c0_5] : memref<1x128x512xbf16, #tpu.memory_space<vmem>>, vector<1x128x512xbf16>
    %6 = vector.shape_cast %5 : vector<1x128x512xbf16> to vector<128x512xbf16>
    %c0_6 = arith.constant 0 : index
    %c0_7 = arith.constant 0 : index
    %c0_8 = arith.constant 0 : index
    %7 = vector.load %arg4[%c0_6, %c0_7, %c0_8] : memref<1x1x512xf32, #tpu.memory_space<vmem>>, vector<1x1x512xf32>
    %8 = vector.shape_cast %7 : vector<1x1x512xf32> to vector<1x512xf32>
    %cst = arith.constant 0.000000e+00 : f32
    %9 = vector.broadcast %cst : f32 to vector<16x128xf32>
    %cst_9 = arith.constant 0.000000e+00 : f32
    %10 = vector.broadcast %cst_9 : f32 to vector<16x128xf32>
    %c0_10 = arith.constant 0 : index
    %c0_11 = arith.constant 0 : index
    %11 = vector.load %arg8[%c0_10, %c0_11] : memref<128x128xbf16, #tpu.memory_space<vmem>>, vector<128x128xbf16>
    %cst_12 = arith.constant dense<0.000000e+00> : vector<128x512xf32>
    %12 = tpu.matmul %11, %4, %cst_12 {dimension_numbers = #tpu.dot_dimension_numbers<[1], [0], [0], [1], [0, 0, 1, 1], [], []>} : vector<128x128xbf16>, vector<128x512xbf16>, vector<128x512xf32> -> vector<128x512xf32>
    %13 = vector.broadcast %8 : vector<1x512xf32> to vector<128x512xf32>
    %14 = arith.addf %12, %13 : vector<128x512xf32>
    %c0_13 = arith.constant 0 : index
    %c0_14 = arith.constant 0 : index
    %15 = vector.load %arg9[%c0_13, %c0_14] : memref<128x512xf32, #tpu.memory_space<vmem>>, vector<128x512xf32>
    tpu.vector_store %arg9[%c0_13, %c0_14], %14 {strides = array<i32>} : memref<128x512xf32, #tpu.memory_space<vmem>>, vector<128x512xf32>,
    %c0_i32_15 = arith.constant 0 : i32
    %c16_i32 = arith.constant 16 : i32
    %16 = arith.muli %c0_i32_15, %c16_i32 : i32
    %c0_i32_16 = arith.constant 0 : i32
    %17 = arith.addi %c0_i32_16, %16 : i32
    %18 = tpu.assume_multiple %17, 16 : i32
    %19 = arith.index_cast %18 : i32 to index
    %c0_17 = arith.constant 0 : index
    %20 = vector.load %arg9[%19, %c0_17] : memref<128x512xf32, #tpu.memory_space<vmem>>, vector<16x512xf32>
    %21 = arith.truncf %9 : vector<16x128xf32> to vector<16x128xbf16>
    %cst_18 = arith.constant dense<0.000000e+00> : vector<16x512xf32>
    %22 = tpu.matmul %21, %6, %cst_18 {dimension_numbers = #tpu.dot_dimension_numbers<[1], [0], [0], [1], [0, 0, 1, 1], [], []>} : vector<16x128xbf16>, vector<128x512xbf16>, vector<16x512xf32> -> vector<16x512xf32>
    %23 = arith.addf %20, %22 : vector<16x512xf32>
    %24 = vector.extract_strided_slice %23 {offsets = [0, 0], sizes = [16, 384], strides = [1, 1]} : vector<16x512xf32> to vector<16x384xf32>
    %25 = arith.negf %24 : vector<16x384xf32>
    %26 = math.exp %25 : vector<16x384xf32>
    %cst_19 = arith.constant 1.000000e+00 : f32
    %27 = vector.broadcast %cst_19 : f32 to vector<16x384xf32>
    %28 = arith.addf %27, %26 : vector<16x384xf32>
    %29 = arith.divf %27, %28 : vector<16x384xf32>
    %30 = vector.extract_strided_slice %29 {offsets = [0, 0], sizes = [16, 128], strides = [1, 1]} : vector<16x384xf32> to vector<16x128xf32>
    %31 = vector.extract_strided_slice %29 {offsets = [0, 128], sizes = [16, 128], strides = [1, 1]} : vector<16x384xf32> to vector<16x128xf32>
    %32 = vector.extract_strided_slice %29 {offsets = [0, 256], sizes = [16, 128], strides = [1, 1]} : vector<16x384xf32> to vector<16x128xf32>
    %33 = vector.extract_strided_slice %23 {offsets = [0, 384], sizes = [16, 128], strides = [1, 1]} : vector<16x512xf32> to vector<16x128xf32>
    %34 = math.tanh %33 : vector<16x128xf32>
    %35 = arith.mulf %31, %10 : vector<16x128xf32>
    %36 = arith.mulf %30, %34 : vector<16x128xf32>
    %37 = arith.addf %35, %36 : vector<16x128xf32>
    %38 = math.tanh %37 : vector<16x128xf32>
    %39 = arith.mulf %32, %38 : vector<16x128xf32>
    %c16_i32_20 = arith.constant 16 : i32
    %40 = arith.muli %c0_i32_15, %c16_i32_20 : i32
    %c0_i32_21 = arith.constant 0 : i32
    %41 = arith.addi %c0_i32_21, %40 : i32
    %42 = tpu.assume_multiple %41, 16 : i32
    %43 = arith.truncf %39 : vector<16x128xf32> to vector<16x128xbf16>
    %44 = arith.index_cast %42 : i32 to index
    %c0_22 = arith.constant 0 : index
    %45 = vector.load %arg8[%44, %c0_22] : memref<128x128xbf16, #tpu.memory_space<vmem>>, vector<16x128xbf16>
    tpu.vector_store %arg8[%44, %c0_22], %43 {strides = array<i32>} : memref<128x128xbf16, #tpu.memory_space<vmem>>, vector<16x128xbf16>,
    %c1_i32 = arith.constant 1 : i32
    %c16_i32_23 = arith.constant 16 : i32
    %46 = arith.muli %c1_i32, %c16_i32_23 : i32
    %c0_i32_24 = arith.constant 0 : i32
    %47 = arith.addi %c0_i32_24, %46 : i32
    %48 = tpu.assume_multiple %47, 16 : i32
    %49 = arith.index_cast %48 : i32 to index
    %c0_25 = arith.constant 0 : index
    %50 = vector.load %arg9[%49, %c0_25] : memref<128x512xf32, #tpu.memory_space<vmem>>, vector<16x512xf32>
    %51 = arith.truncf %39 : vector<16x128xf32> to vector<16x128xbf16>
    %cst_26 = arith.constant dense<0.000000e+00> : vector<16x512xf32>
    %52 = tpu.matmul %51, %6, %cst_26 {dimension_numbers = #tpu.dot_dimension_numbers<[1], [0], [0], [1], [0, 0, 1, 1], [], []>} : vector<16x128xbf16>, vector<128x512xbf16>, vector<16x512xf32> -> vector<16x512xf32>
    %53 = arith.addf %50, %52 : vector<16x512xf32>
    %54 = vector.extract_strided_slice %53 {offsets = [0, 0], sizes = [16, 384], strides = [1, 1]} : vector<16x512xf32> to vector<16x384xf32>
    %55 = arith.negf %54 : vector<16x384xf32>
    %56 = math.exp %55 : vector<16x384xf32>
    %cst_27 = arith.constant 1.000000e+00 : f32
    %57 = vector.broadcast %cst_27 : f32 to vector<16x384xf32>
    %58 = arith.addf %57, %56 : vector<16x384xf32>
    %59 = arith.divf %57, %58 : vector<16x384xf32>
    %60 = vector.extract_strided_slice %59 {offsets = [0, 0], sizes = [16, 128], strides = [1, 1]} : vector<16x384xf32> to vector<16x128xf32>
    %61 = vector.extract_strided_slice %59 {offsets = [0, 128], sizes = [16, 128], strides = [1, 1]} : vector<16x384xf32> to vector<16x128xf32>
    %62 = vector.extract_strided_slice %59 {offsets = [0, 256], sizes = [16, 128], strides = [1, 1]} : vector<16x384xf32> to vector<16x128xf32>
    %63 = vector.extract_strided_slice %53 {offsets = [0, 384], sizes = [16, 128], strides = [1, 1]} : vector<16x512xf32> to vector<16x128xf32>
    %64 = math.tanh %63 : vector<16x128xf32>
    %65 = arith.mulf %61, %37 : vector<16x128xf32>
    %66 = arith.mulf %60, %64 : vector<16x128xf32>
    %67 = arith.addf %65, %66 : vector<16x128xf32>
    %68 = math.tanh %67 : vector<16x128xf32>
    %69 = arith.mulf %62, %68 : vector<16x128xf32>
    %c16_i32_28 = arith.constant 16 : i32
    %70 = arith.muli %c1_i32, %c16_i32_28 : i32
    %c0_i32_29 = arith.constant 0 : i32
    %71 = arith.addi %c0_i32_29, %70 : i32
    %72 = tpu.assume_multiple %71, 16 : i32
    %73 = arith.truncf %69 : vector<16x128xf32> to vector<16x128xbf16>
    %74 = arith.index_cast %72 : i32 to index
    %c0_30 = arith.constant 0 : index
    %75 = vector.load %arg8[%74, %c0_30] : memref<128x128xbf16, #tpu.memory_space<vmem>>, vector<16x128xbf16>
    tpu.vector_store %arg8[%74, %c0_30], %73 {strides = array<i32>} : memref<128x128xbf16, #tpu.memory_space<vmem>>, vector<16x128xbf16>,
    %c2_i32 = arith.constant 2 : i32
    %c16_i32_31 = arith.constant 16 : i32
    %76 = arith.muli %c2_i32, %c16_i32_31 : i32
    %c0_i32_32 = arith.constant 0 : i32
    %77 = arith.addi %c0_i32_32, %76 : i32
    %78 = tpu.assume_multiple %77, 16 : i32
    %79 = arith.index_cast %78 : i32 to index
    %c0_33 = arith.constant 0 : index
    %80 = vector.load %arg9[%79, %c0_33] : memref<128x512xf32, #tpu.memory_space<vmem>>, vector<16x512xf32>
    %81 = arith.truncf %69 : vector<16x128xf32> to vector<16x128xbf16>
    %cst_34 = arith.constant dense<0.000000e+00> : vector<16x512xf32>
    %82 = tpu.matmul %81, %6, %cst_34 {dimension_numbers = #tpu.dot_dimension_numbers<[1], [0], [0], [1], [0, 0, 1, 1], [], []>} : vector<16x128xbf16>, vector<128x512xbf16>, vector<16x512xf32> -> vector<16x512xf32>
    %83 = arith.addf %80, %82 : vector<16x512xf32>
    %84 = vector.extract_strided_slice %83 {offsets = [0, 0], sizes = [16, 384], strides = [1, 1]} : vector<16x512xf32> to vector<16x384xf32>
    %85 = arith.negf %84 : vector<16x384xf32>
    %86 = math.exp %85 : vector<16x384xf32>
    %cst_35 = arith.constant 1.000000e+00 : f32
    %87 = vector.broadcast %cst_35 : f32 to vector<16x384xf32>
    %88 = arith.addf %87, %86 : vector<16x384xf32>
    %89 = arith.divf %87, %88 : vector<16x384xf32>
    %90 = vector.extract_strided_slice %89 {offsets = [0, 0], sizes = [16, 128], strides = [1, 1]} : vector<16x384xf32> to vector<16x128xf32>
    %91 = vector.extract_strided_slice %89 {offsets = [0, 128], sizes = [16, 128], strides = [1, 1]} : vector<16x384xf32> to vector<16x128xf32>
    %92 = vector.extract_strided_slice %89 {offsets = [0, 256], sizes = [16, 128], strides = [1, 1]} : vector<16x384xf32> to vector<16x128xf32>
    %93 = vector.extract_strided_slice %83 {offsets = [0, 384], sizes = [16, 128], strides = [1, 1]} : vector<16x512xf32> to vector<16x128xf32>
    %94 = math.tanh %93 : vector<16x128xf32>
    %95 = arith.mulf %91, %67 : vector<16x128xf32>
    %96 = arith.mulf %90, %94 : vector<16x128xf32>
    %97 = arith.addf %95, %96 : vector<16x128xf32>
    %98 = math.tanh %97 : vector<16x128xf32>
    %99 = arith.mulf %92, %98 : vector<16x128xf32>
    %c16_i32_36 = arith.constant 16 : i32
    %100 = arith.muli %c2_i32, %c16_i32_36 : i32
    %c0_i32_37 = arith.constant 0 : i32
    %101 = arith.addi %c0_i32_37, %100 : i32
    %102 = tpu.assume_multiple %101, 16 : i32
    %103 = arith.truncf %99 : vector<16x128xf32> to vector<16x128xbf16>
    %104 = arith.index_cast %102 : i32 to index
    %c0_38 = arith.constant 0 : index
    %105 = vector.load %arg8[%104, %c0_38] : memref<128x128xbf16, #tpu.memory_space<vmem>>, vector<16x128xbf16>
    tpu.vector_store %arg8[%104, %c0_38], %103 {strides = array<i32>} : memref<128x128xbf16, #tpu.memory_space<vmem>>, vector<16x128xbf16>,
    %c3_i32 = arith.constant 3 : i32
    %c16_i32_39 = arith.constant 16 : i32
    %106 = arith.muli %c3_i32, %c16_i32_39 : i32
    %c0_i32_40 = arith.constant 0 : i32
    %107 = arith.addi %c0_i32_40, %106 : i32
    %108 = tpu.assume_multiple %107, 16 : i32
    %109 = arith.index_cast %108 : i32 to index
    %c0_41 = arith.constant 0 : index
    %110 = vector.load %arg9[%109, %c0_41] : memref<128x512xf32, #tpu.memory_space<vmem>>, vector<16x512xf32>
    %111 = arith.truncf %99 : vector<16x128xf32> to vector<16x128xbf16>
    %cst_42 = arith.constant dense<0.000000e+00> : vector<16x512xf32>
    %112 = tpu.matmul %111, %6, %cst_42 {dimension_numbers = #tpu.dot_dimension_numbers<[1], [0], [0], [1], [0, 0, 1, 1], [], []>} : vector<16x128xbf16>, vector<128x512xbf16>, vector<16x512xf32> -> vector<16x512xf32>
    %113 = arith.addf %110, %112 : vector<16x512xf32>
    %114 = vector.extract_strided_slice %113 {offsets = [0, 0], sizes = [16, 384], strides = [1, 1]} : vector<16x512xf32> to vector<16x384xf32>
    %115 = arith.negf %114 : vector<16x384xf32>
    %116 = math.exp %115 : vector<16x384xf32>
    %cst_43 = arith.constant 1.000000e+00 : f32
    %117 = vector.broadcast %cst_43 : f32 to vector<16x384xf32>
    %118 = arith.addf %117, %116 : vector<16x384xf32>
    %119 = arith.divf %117, %118 : vector<16x384xf32>
    %120 = vector.extract_strided_slice %119 {offsets = [0, 0], sizes = [16, 128], strides = [1, 1]} : vector<16x384xf32> to vector<16x128xf32>
    %121 = vector.extract_strided_slice %119 {offsets = [0, 128], sizes = [16, 128], strides = [1, 1]} : vector<16x384xf32> to vector<16x128xf32>
    %122 = vector.extract_strided_slice %119 {offsets = [0, 256], sizes = [16, 128], strides = [1, 1]} : vector<16x384xf32> to vector<16x128xf32>
    %123 = vector.extract_strided_slice %113 {offsets = [0, 384], sizes = [16, 128], strides = [1, 1]} : vector<16x512xf32> to vector<16x128xf32>
    %124 = math.tanh %123 : vector<16x128xf32>
    %125 = arith.mulf %121, %97 : vector<16x128xf32>
    %126 = arith.mulf %120, %124 : vector<16x128xf32>
    %127 = arith.addf %125, %126 : vector<16x128xf32>
    %128 = math.tanh %127 : vector<16x128xf32>
    %129 = arith.mulf %122, %128 : vector<16x128xf32>
    %c16_i32_44 = arith.constant 16 : i32
    %130 = arith.muli %c3_i32, %c16_i32_44 : i32
    %c0_i32_45 = arith.constant 0 : i32
    %131 = arith.addi %c0_i32_45, %130 : i32
    %132 = tpu.assume_multiple %131, 16 : i32
    %133 = arith.truncf %129 : vector<16x128xf32> to vector<16x128xbf16>
    %134 = arith.index_cast %132 : i32 to index
    %c0_46 = arith.constant 0 : index
    %135 = vector.load %arg8[%134, %c0_46] : memref<128x128xbf16, #tpu.memory_space<vmem>>, vector<16x128xbf16>
    tpu.vector_store %arg8[%134, %c0_46], %133 {strides = array<i32>} : memref<128x128xbf16, #tpu.memory_space<vmem>>, vector<16x128xbf16>,
    %c4_i32 = arith.constant 4 : i32
    %c16_i32_47 = arith.constant 16 : i32
    %136 = arith.muli %c4_i32, %c16_i32_47 : i32
    %c0_i32_48 = arith.constant 0 : i32
    %137 = arith.addi %c0_i32_48, %136 : i32
    %138 = tpu.assume_multiple %137, 16 : i32
    %139 = arith.index_cast %138 : i32 to index
    %c0_49 = arith.constant 0 : index
    %140 = vector.load %arg9[%139, %c0_49] : memref<128x512xf32, #tpu.memory_space<vmem>>, vector<16x512xf32>
    %141 = arith.truncf %129 : vector<16x128xf32> to vector<16x128xbf16>
    %cst_50 = arith.constant dense<0.000000e+00> : vector<16x512xf32>
    %142 = tpu.matmul %141, %6, %cst_50 {dimension_numbers = #tpu.dot_dimension_numbers<[1], [0], [0], [1], [0, 0, 1, 1], [], []>} : vector<16x128xbf16>, vector<128x512xbf16>, vector<16x512xf32> -> vector<16x512xf32>
    %143 = arith.addf %140, %142 : vector<16x512xf32>
    %144 = vector.extract_strided_slice %143 {offsets = [0, 0], sizes = [16, 384], strides = [1, 1]} : vector<16x512xf32> to vector<16x384xf32>
    %145 = arith.negf %144 : vector<16x384xf32>
    %146 = math.exp %145 : vector<16x384xf32>
    %cst_51 = arith.constant 1.000000e+00 : f32
    %147 = vector.broadcast %cst_51 : f32 to vector<16x384xf32>
    %148 = arith.addf %147, %146 : vector<16x384xf32>
    %149 = arith.divf %147, %148 : vector<16x384xf32>
    %150 = vector.extract_strided_slice %149 {offsets = [0, 0], sizes = [16, 128], strides = [1, 1]} : vector<16x384xf32> to vector<16x128xf32>
    %151 = vector.extract_strided_slice %149 {offsets = [0, 128], sizes = [16, 128], strides = [1, 1]} : vector<16x384xf32> to vector<16x128xf32>
    %152 = vector.extract_strided_slice %149 {offsets = [0, 256], sizes = [16, 128], strides = [1, 1]} : vector<16x384xf32> to vector<16x128xf32>
    %153 = vector.extract_strided_slice %143 {offsets = [0, 384], sizes = [16, 128], strides = [1, 1]} : vector<16x512xf32> to vector<16x128xf32>
    %154 = math.tanh %153 : vector<16x128xf32>
    %155 = arith.mulf %151, %127 : vector<16x128xf32>
    %156 = arith.mulf %150, %154 : vector<16x128xf32>
    %157 = arith.addf %155, %156 : vector<16x128xf32>
    %158 = math.tanh %157 : vector<16x128xf32>
    %159 = arith.mulf %152, %158 : vector<16x128xf32>
    %c16_i32_52 = arith.constant 16 : i32
    %160 = arith.muli %c4_i32, %c16_i32_52 : i32
    %c0_i32_53 = arith.constant 0 : i32
    %161 = arith.addi %c0_i32_53, %160 : i32
    %162 = tpu.assume_multiple %161, 16 : i32
    %163 = arith.truncf %159 : vector<16x128xf32> to vector<16x128xbf16>
    %164 = arith.index_cast %162 : i32 to index
    %c0_54 = arith.constant 0 : index
    %165 = vector.load %arg8[%164, %c0_54] : memref<128x128xbf16, #tpu.memory_space<vmem>>, vector<16x128xbf16>
    tpu.vector_store %arg8[%164, %c0_54], %163 {strides = array<i32>} : memref<128x128xbf16, #tpu.memory_space<vmem>>, vector<16x128xbf16>,
    %c5_i32 = arith.constant 5 : i32
    %c16_i32_55 = arith.constant 16 : i32
    %166 = arith.muli %c5_i32, %c16_i32_55 : i32
    %c0_i32_56 = arith.constant 0 : i32
    %167 = arith.addi %c0_i32_56, %166 : i32
    %168 = tpu.assume_multiple %167, 16 : i32
    %169 = arith.index_cast %168 : i32 to index
    %c0_57 = arith.constant 0 : index
    %170 = vector.load %arg9[%169, %c0_57] : memref<128x512xf32, #tpu.memory_space<vmem>>, vector<16x512xf32>
    %171 = arith.truncf %159 : vector<16x128xf32> to vector<16x128xbf16>
    %cst_58 = arith.constant dense<0.000000e+00> : vector<16x512xf32>
    %172 = tpu.matmul %171, %6, %cst_58 {dimension_numbers = #tpu.dot_dimension_numbers<[1], [0], [0], [1], [0, 0, 1, 1], [], []>} : vector<16x128xbf16>, vector<128x512xbf16>, vector<16x512xf32> -> vector<16x512xf32>
    %173 = arith.addf %170, %172 : vector<16x512xf32>
    %174 = vector.extract_strided_slice %173 {offsets = [0, 0], sizes = [16, 384], strides = [1, 1]} : vector<16x512xf32> to vector<16x384xf32>
    %175 = arith.negf %174 : vector<16x384xf32>
    %176 = math.exp %175 : vector<16x384xf32>
    %cst_59 = arith.constant 1.000000e+00 : f32
    %177 = vector.broadcast %cst_59 : f32 to vector<16x384xf32>
    %178 = arith.addf %177, %176 : vector<16x384xf32>
    %179 = arith.divf %177, %178 : vector<16x384xf32>
    %180 = vector.extract_strided_slice %179 {offsets = [0, 0], sizes = [16, 128], strides = [1, 1]} : vector<16x384xf32> to vector<16x128xf32>
    %181 = vector.extract_strided_slice %179 {offsets = [0, 128], sizes = [16, 128], strides = [1, 1]} : vector<16x384xf32> to vector<16x128xf32>
    %182 = vector.extract_strided_slice %179 {offsets = [0, 256], sizes = [16, 128], strides = [1, 1]} : vector<16x384xf32> to vector<16x128xf32>
    %183 = vector.extract_strided_slice %173 {offsets = [0, 384], sizes = [16, 128], strides = [1, 1]} : vector<16x512xf32> to vector<16x128xf32>
    %184 = math.tanh %183 : vector<16x128xf32>
    %185 = arith.mulf %181, %157 : vector<16x128xf32>
    %186 = arith.mulf %180, %184 : vector<16x128xf32>
    %187 = arith.addf %185, %186 : vector<16x128xf32>
    %188 = math.tanh %187 : vector<16x128xf32>
    %189 = arith.mulf %182, %188 : vector<16x128xf32>
    %c16_i32_60 = arith.constant 16 : i32
    %190 = arith.muli %c5_i32, %c16_i32_60 : i32
    %c0_i32_61 = arith.constant 0 : i32
    %191 = arith.addi %c0_i32_61, %190 : i32
    %192 = tpu.assume_multiple %191, 16 : i32
    %193 = arith.truncf %189 : vector<16x128xf32> to vector<16x128xbf16>
    %194 = arith.index_cast %192 : i32 to index
    %c0_62 = arith.constant 0 : index
    %195 = vector.load %arg8[%194, %c0_62] : memref<128x128xbf16, #tpu.memory_space<vmem>>, vector<16x128xbf16>
    tpu.vector_store %arg8[%194, %c0_62], %193 {strides = array<i32>} : memref<128x128xbf16, #tpu.memory_space<vmem>>, vector<16x128xbf16>,
    %c6_i32 = arith.constant 6 : i32
    %c16_i32_63 = arith.constant 16 : i32
    %196 = arith.muli %c6_i32, %c16_i32_63 : i32
    %c0_i32_64 = arith.constant 0 : i32
    %197 = arith.addi %c0_i32_64, %196 : i32
    %198 = tpu.assume_multiple %197, 16 : i32
    %199 = arith.index_cast %198 : i32 to index
    %c0_65 = arith.constant 0 : index
    %200 = vector.load %arg9[%199, %c0_65] : memref<128x512xf32, #tpu.memory_space<vmem>>, vector<16x512xf32>
    %201 = arith.truncf %189 : vector<16x128xf32> to vector<16x128xbf16>
    %cst_66 = arith.constant dense<0.000000e+00> : vector<16x512xf32>
    %202 = tpu.matmul %201, %6, %cst_66 {dimension_numbers = #tpu.dot_dimension_numbers<[1], [0], [0], [1], [0, 0, 1, 1], [], []>} : vector<16x128xbf16>, vector<128x512xbf16>, vector<16x512xf32> -> vector<16x512xf32>
    %203 = arith.addf %200, %202 : vector<16x512xf32>
    %204 = vector.extract_strided_slice %203 {offsets = [0, 0], sizes = [16, 384], strides = [1, 1]} : vector<16x512xf32> to vector<16x384xf32>
    %205 = arith.negf %204 : vector<16x384xf32>
    %206 = math.exp %205 : vector<16x384xf32>
    %cst_67 = arith.constant 1.000000e+00 : f32
    %207 = vector.broadcast %cst_67 : f32 to vector<16x384xf32>
    %208 = arith.addf %207, %206 : vector<16x384xf32>
    %209 = arith.divf %207, %208 : vector<16x384xf32>
    %210 = vector.extract_strided_slice %209 {offsets = [0, 0], sizes = [16, 128], strides = [1, 1]} : vector<16x384xf32> to vector<16x128xf32>
    %211 = vector.extract_strided_slice %209 {offsets = [0, 128], sizes = [16, 128], strides = [1, 1]} : vector<16x384xf32> to vector<16x128xf32>
    %212 = vector.extract_strided_slice %209 {offsets = [0, 256], sizes = [16, 128], strides = [1, 1]} : vector<16x384xf32> to vector<16x128xf32>
    %213 = vector.extract_strided_slice %203 {offsets = [0, 384], sizes = [16, 128], strides = [1, 1]} : vector<16x512xf32> to vector<16x128xf32>
    %214 = math.tanh %213 : vector<16x128xf32>
    %215 = arith.mulf %211, %187 : vector<16x128xf32>
    %216 = arith.mulf %210, %214 : vector<16x128xf32>
    %217 = arith.addf %215, %216 : vector<16x128xf32>
    %218 = math.tanh %217 : vector<16x128xf32>
    %219 = arith.mulf %212, %218 : vector<16x128xf32>
    %c16_i32_68 = arith.constant 16 : i32
    %220 = arith.muli %c6_i32, %c16_i32_68 : i32
    %c0_i32_69 = arith.constant 0 : i32
    %221 = arith.addi %c0_i32_69, %220 : i32
    %222 = tpu.assume_multiple %221, 16 : i32
    %223 = arith.truncf %219 : vector<16x128xf32> to vector<16x128xbf16>
    %224 = arith.index_cast %222 : i32 to index
    %c0_70 = arith.constant 0 : index
    %225 = vector.load %arg8[%224, %c0_70] : memref<128x128xbf16, #tpu.memory_space<vmem>>, vector<16x128xbf16>
    tpu.vector_store %arg8[%224, %c0_70], %223 {strides = array<i32>} : memref<128x128xbf16, #tpu.memory_space<vmem>>, vector<16x128xbf16>,
    %c7_i32 = arith.constant 7 : i32
    %c16_i32_71 = arith.constant 16 : i32
    %226 = arith.muli %c7_i32, %c16_i32_71 : i32
    %c0_i32_72 = arith.constant 0 : i32
    %227 = arith.addi %c0_i32_72, %226 : i32
    %228 = tpu.assume_multiple %227, 16 : i32
    %229 = arith.index_cast %228 : i32 to index
    %c0_73 = arith.constant 0 : index
    %230 = vector.load %arg9[%229, %c0_73] : memref<128x512xf32, #tpu.memory_space<vmem>>, vector<16x512xf32>
    %231 = arith.truncf %219 : vector<16x128xf32> to vector<16x128xbf16>
    %cst_74 = arith.constant dense<0.000000e+00> : vector<16x512xf32>
    %232 = tpu.matmul %231, %6, %cst_74 {dimension_numbers = #tpu.dot_dimension_numbers<[1], [0], [0], [1], [0, 0, 1, 1], [], []>} : vector<16x128xbf16>, vector<128x512xbf16>, vector<16x512xf32> -> vector<16x512xf32>
    %233 = arith.addf %230, %232 : vector<16x512xf32>
    %234 = vector.extract_strided_slice %233 {offsets = [0, 0], sizes = [16, 384], strides = [1, 1]} : vector<16x512xf32> to vector<16x384xf32>
    %235 = arith.negf %234 : vector<16x384xf32>
    %236 = math.exp %235 : vector<16x384xf32>
    %cst_75 = arith.constant 1.000000e+00 : f32
    %237 = vector.broadcast %cst_75 : f32 to vector<16x384xf32>
    %238 = arith.addf %237, %236 : vector<16x384xf32>
    %239 = arith.divf %237, %238 : vector<16x384xf32>
    %240 = vector.extract_strided_slice %239 {offsets = [0, 0], sizes = [16, 128], strides = [1, 1]} : vector<16x384xf32> to vector<16x128xf32>
    %241 = vector.extract_strided_slice %239 {offsets = [0, 128], sizes = [16, 128], strides = [1, 1]} : vector<16x384xf32> to vector<16x128xf32>
    %242 = vector.extract_strided_slice %239 {offsets = [0, 256], sizes = [16, 128], strides = [1, 1]} : vector<16x384xf32> to vector<16x128xf32>
    %243 = vector.extract_strided_slice %233 {offsets = [0, 384], sizes = [16, 128], strides = [1, 1]} : vector<16x512xf32> to vector<16x128xf32>
    %244 = math.tanh %243 : vector<16x128xf32>
    %245 = arith.mulf %241, %217 : vector<16x128xf32>
    %246 = arith.mulf %240, %244 : vector<16x128xf32>
    %247 = arith.addf %245, %246 : vector<16x128xf32>
    %248 = math.tanh %247 : vector<16x128xf32>
    %249 = arith.mulf %242, %248 : vector<16x128xf32>
    %c16_i32_76 = arith.constant 16 : i32
    %250 = arith.muli %c7_i32, %c16_i32_76 : i32
    %c0_i32_77 = arith.constant 0 : i32
    %251 = arith.addi %c0_i32_77, %250 : i32
    %252 = tpu.assume_multiple %251, 16 : i32
    %253 = arith.truncf %249 : vector<16x128xf32> to vector<16x128xbf16>
    %254 = arith.index_cast %252 : i32 to index
    %c0_78 = arith.constant 0 : index
    %255 = vector.load %arg8[%254, %c0_78] : memref<128x128xbf16, #tpu.memory_space<vmem>>, vector<16x128xbf16>
    tpu.vector_store %arg8[%254, %c0_78], %253 {strides = array<i32>} : memref<128x128xbf16, #tpu.memory_space<vmem>>, vector<16x128xbf16>,
    %c8_i32 = arith.constant 8 : i32
    %c1_i32_79 = arith.constant 1 : i32
    %256 = arith.cmpi eq, %arg0, %c1_i32_79 : i32
    %257 = arith.extui %256 : i1 to i32
    %c0_i32_80 = arith.constant 0 : i32
    %258 = arith.cmpi ne, %257, %c0_i32_80 : i32
    scf.if %258 {
      %c0_81 = arith.constant 0 : index
      %c0_82 = arith.constant 0 : index
      %259 = vector.load %arg5[%c0_81, %c0_82] : memref<128x128xf32, #tpu.memory_space<vmem>>, vector<128x128xf32>
      %cst_83 = arith.constant dense<0.000000e+00> : vector<16x128xf32>
      %260 = tpu.matmul %249, %259, %cst_83 {dimension_numbers = #tpu.dot_dimension_numbers<[1], [0], [0], [1], [0, 0, 1, 1], [], []>} : vector<16x128xf32>, vector<128x128xf32>, vector<16x128xf32> -> vector<16x128xf32>
      %c0_84 = arith.constant 0 : index
      %c0_85 = arith.constant 0 : index
      %261 = vector.load %arg6[%c0_84, %c0_85] : memref<1x128xf32, #tpu.memory_space<vmem>>, vector<1x128xf32>
      %262 = vector.broadcast %261 : vector<1x128xf32> to vector<16x128xf32>
      %263 = arith.addf %260, %262 : vector<16x128xf32>
      %c0_86 = arith.constant 0 : index
      %c0_87 = arith.constant 0 : index
      %264 = vector.load %arg7[%c0_86, %c0_87] : memref<16x128xf32, #tpu.memory_space<vmem>>, vector<16x128xf32>
      tpu.vector_store %arg7[%c0_86, %c0_87], %263 {strides = array<i32>} : memref<16x128xf32, #tpu.memory_space<vmem>>, vector<16x128xf32>,
    } else {
    }
    return
  }
  func.func @transform_1(%arg0: i32) -> (i32, i32, i32) {
    %c0_i32 = arith.constant 0 : i32
    %c0_i32_0 = arith.constant 0 : i32
    %c0_i32_1 = arith.constant 0 : i32
    return %arg0, %c0_i32, %c0_i32_0 : i32, i32, i32
  }
  func.func @transform_2(%arg0: i32) -> (i32, i32, i32) {
    %c0_i32 = arith.constant 0 : i32
    %c0_i32_0 = arith.constant 0 : i32
    %c0_i32_1 = arith.constant 0 : i32
    return %arg0, %c0_i32, %c0_i32_0 : i32, i32, i32
  }
  func.func @transform_3(%arg0: i32) -> (i32, i32, i32) {
    %c0_i32 = arith.constant 0 : i32
    %c0_i32_0 = arith.constant 0 : i32
    %c0_i32_1 = arith.constant 0 : i32
    return %arg0, %c0_i32, %c0_i32_0 : i32, i32, i32
  }
  func.func @transform_4(%arg0: i32) -> (i32, i32) {
    %c0_i32 = arith.constant 0 : i32
    %c0_i32_0 = arith.constant 0 : i32
    %c0_i32_1 = arith.constant 0 : i32
    return %c0_i32, %c0_i32_0 : i32, i32
  }
  func.func @transform_5(%arg0: i32) -> (i32, i32) {
    %c0_i32 = arith.constant 0 : i32
    %c0_i32_0 = arith.constant 0 : i32
    %c0_i32_1 = arith.constant 0 : i32
    return %c0_i32, %c0_i32_0 : i32, i32
  }
  func.func @transform_6(%arg0: i32) -> (i32, i32) {
    %c0_i32 = arith.constant 0 : i32
    %c0_i32_0 = arith.constant 0 : i32
    %c0_i32_1 = arith.constant 0 : i32
    return %c0_i32, %c0_i32_0 : i32, i32
  }
}

</mosaic_0001>

<llo_original>
// kernel: tpu_custom_call.1
$region0: #{tpu_custom_call.1}
  #allocation0 [shape = 'u32[]', space=smem, size = 0x4, offset = 0x4, fixed_abs, tag = 'smem constant byte address 0x4 - core index']
  #allocation1 [shape = 'u32[144,128]{1,0:T(1,128)}', space=vmem, size = 0x12000, scoped, tag = 'internal scratch']
  #allocation2 [shape = 'bf16[128,128]{1,0:T(16,128)(2,1)}', space=vmem, size = 0x8000, scoped, tag = 'scratch operand']
  #allocation3 [shape = 'f32[128,512]{1,0:T(8,128)}', space=vmem, size = 0x40000, scoped, tag = 'scratch operand']
  #allocation4 [shape = 's32[1]{0}', space=sflag, size = 0x4, scoped, tag = 'scratch operand']
  #allocation12 [shape = 's32[]', space=sflag, size = 0x4, offset = 0, fixed_abs, tag = 'sflag constant byte address 0x0 - dummy sync flag']
  #allocation13 [shape = 's32[]', space=sflag, size = 0x4, offset = 0, fixed_abs, tag = 'sflag constant byte address 0x0 - dummy sync flag']
  #allocation14 [shape = 'u32[]', space=smem, size = 0x4, offset = 0x44, fixed_abs, tag = 'smem constant byte address 0x44 - assertion arg 0']
  #allocation15 [shape = 'u32[]', space=smem, size = 0x4, offset = 0x48, fixed_abs, tag = 'smem constant byte address 0x48 - assertion arg 1']
  %s0 = inlined_call_operand.hbm [shape: bf16[128,128], index: 0, kind: input, shape index: {}]
  %s1 = inlined_call_operand.hbm [shape: bf16[2,128,512], index: 1, kind: input, shape index: {}]
  %s2 = inlined_call_operand.hbm [shape: bf16[2,128,512], index: 2, kind: input, shape index: {}]
  %s3 = inlined_call_operand.vmem [shape: f32[2,1,512], index: 3, kind: input, shape index: {}]
  %s4 = inlined_call_operand.hbm [shape: f32[128,128], index: 4, kind: input, shape index: {}]
  %s5 = inlined_call_operand.vmem [shape: f32[1,128], index: 5, kind: input, shape index: {}]
  %s6 = inlined_call_operand.hbm [shape: f32[16,128], index: 6, kind: output, shape index: {}]
  %s7 = sld [smem:[#allocation0]]
  $region77: #{tpu_custom_call.1} parent=0
    _
  %s9 = ssub.s32 1, %s7
  %s10 = scalar_select 0, %s9, %s7
  $region1: #{tpu_custom_call.1} parent=0
    #allocation5 [shape = 'u8[262144]{0}', space=vmem, size = 0x40000, scoped, tag = 'input window, operand 1']
    #allocation6 [shape = 's32[2]{0}', space=sflag, size = 0x8, scoped, tag = 'scoped memory for tpu_custom_call.1']
    #allocation7 [shape = 's32[2]{0}', space=sflag, size = 0x8, scoped, tag = 'scoped memory for tpu_custom_call.1']
    #allocation8 [shape = 'u8[262144]{0}', space=vmem, size = 0x40000, scoped, tag = 'input window, operand 2']
    #allocation9 [shape = 's32[2]{0}', space=sflag, size = 0x8, scoped, tag = 'scoped memory for tpu_custom_call.1']
    #allocation10 [shape = 'u8[65536]{0}', space=vmem, size = 0x10000, scoped, tag = 'input window, operand 4, single buffered']
    #allocation11 [shape = 'u8[8192]{0}', space=vmem, size = 0x2000, scoped, tag = 'output window, operand 0, single buffered']
    %11 = vsyncpa [#allocation6], 0
    %s12 = scalar_lea.sflag [#allocation6], 1
    %13 = vsyncpa %s12, 0
    %14 = vsyncpa [#allocation9], 0
    %s15 = scalar_lea.sflag [#allocation9], 1
    %16 = vsyncpa %s15, 0
    %17 = vsyncpa [#allocation7], 0
    loop: start=0, step=1, limit=4
    $region2: #{tpu_custom_call.1} parent=1 // loop_pre_header
      _
    $region3: #{tpu_custom_call.1} parent=1 // loop_header
      %s19 = sphi 0, %s23
      %p20 = scmp.ge.s32.totalorder %s19, 4
      %s29 = sphi 0, %s31
      %s32 = sphi 0, %s29
      %s33 = sphi 0, %s32
      %s49 = sphi 0, %s33
      %s55 = sphi 0, %s57
      %s58 = sphi 0, %s55
      %s59 = sphi 0, %s58
      %s75 = sphi 0, %s59
      %s81 = sphi 0, %s83
      %s84 = sphi 0, %s81
      %s85 = sphi 0, %s84
      %s101 = sphi 0, %s85
      %s105 = sphi 0, %s105
      %s107 = sphi 0, %s105
      %s108 = sphi 0, %s107
      %s122 = sphi 0, %s108
      %s126 = sphi 0, %s126
      %s128 = sphi 0, %s126
      %s129 = sphi 0, %s128
      %s143 = sphi 0, %s129
      %s147 = sphi 0, %s147
      %s149 = sphi 0, %s147
      %s150 = sphi 0, %s149
      %s164 = sphi 0, %s150
    $region4: #{tpu_custom_call.1} parent=1 // loop_header_branch
      %22 = sbr.rel (%p20) target = $region8
    $region5: #{tpu_custom_call.1} parent=1 // loop_body
      %s24 = ssub.s32 %s19, 1
      %s25 = ssub.s32 %s19, 2
      %s26 = sadd.s32 %s19, 1
      %s27 = ssub.s32 %s19, %s26
      %p28 = scmp.eq.s32.totalorder %s27, 0
      %s30 = sadd.s32 %s29, 1
      %s31 = scalar_select %p28, %s29, %s30
      %p34 = pneg %p28
      %p35 = scmp.eq.s32.totalorder %s19, 1
      %p36 = por %p34, %p35
      %p37 = scmp.ne.s32.totalorder %s29, %s32
      %p38 = scmp.eq.s32.totalorder %s19, 0
      %p39 = por %p37, %p38
      %p40 = scmp.ne.s32.totalorder %s29, %s32
      %p41 = scmp.eq.s32.totalorder %s24, 1
      %p42 = por %p40, %p41
      %p43 = scmp.ne.s32.totalorder %s32, %s33
      %p44 = scmp.eq.s32.totalorder %s24, 0
      %p45 = por %p43, %p44
      %p46 = scmp.ne.s32.totalorder %s32, %s33
      %p47 = scmp.eq.s32.totalorder %s25, 1
      %p48 = por %p46, %p47
      %p50 = scmp.ne.s32.totalorder %s33, %s49
      %p51 = scmp.eq.s32.totalorder %s25, 0
      %p52 = por %p50, %p51
      %s53 = ssub.s32 %s19, %s26
      %p54 = scmp.eq.s32.totalorder %s53, 0
      %s56 = sadd.s32 %s55, 1
      %s57 = scalar_select %p54, %s55, %s56
      %p60 = pneg %p54
      %p61 = scmp.eq.s32.totalorder %s19, 1
      %p62 = por %p60, %p61
      %p63 = scmp.ne.s32.totalorder %s55, %s58
      %p64 = scmp.eq.s32.totalorder %s19, 0
      %p65 = por %p63, %p64
      %p66 = scmp.ne.s32.totalorder %s55, %s58
      %p67 = scmp.eq.s32.totalorder %s24, 1
      %p68 = por %p66, %p67
      %p69 = scmp.ne.s32.totalorder %s58, %s59
      %p70 = scmp.eq.s32.totalorder %s24, 0
      %p71 = por %p69, %p70
      %p72 = scmp.ne.s32.totalorder %s58, %s59
      %p73 = scmp.eq.s32.totalorder %s25, 1
      %p74 = por %p72, %p73
      %p76 = scmp.ne.s32.totalorder %s59, %s75
      %p77 = scmp.eq.s32.totalorder %s25, 0
      %p78 = por %p76, %p77
      %s79 = ssub.s32 %s19, %s26
      %p80 = scmp.eq.s32.totalorder %s79, 0
      %s82 = sadd.s32 %s81, 1
      %s83 = scalar_select %p80, %s81, %s82
      %p86 = pneg %p80
      %p87 = scmp.eq.s32.totalorder %s19, 1
      %p88 = por %p86, %p87
      %p89 = scmp.ne.s32.totalorder %s81, %s84
      %p90 = scmp.eq.s32.totalorder %s19, 0
      %p91 = por %p89, %p90
      %p92 = scmp.ne.s32.totalorder %s81, %s84
      %p93 = scmp.eq.s32.totalorder %s24, 1
      %p94 = por %p92, %p93
      %p95 = scmp.ne.s32.totalorder %s84, %s85
      %p96 = scmp.eq.s32.totalorder %s24, 0
      %p97 = por %p95, %p96
      %p98 = scmp.ne.s32.totalorder %s84, %s85
      %p99 = scmp.eq.s32.totalorder %s25, 1
      %p100 = por %p98, %p99
      %p102 = scmp.ne.s32.totalorder %s85, %s101
      %p103 = scmp.eq.s32.totalorder %s25, 0
      %p104 = por %p102, %p103
      %s106 = sadd.s32 %s105, 1
      %p109 = scmp.eq.s32.totalorder %s19, 1
      %p110 = scmp.ne.s32.totalorder %s105, %s107
      %p111 = scmp.eq.s32.totalorder %s19, 0
      %p112 = por %p110, %p111
      %p113 = scmp.ne.s32.totalorder %s105, %s107
      %p114 = scmp.eq.s32.totalorder %s24, 1
      %p115 = por %p113, %p114
      %p116 = scmp.ne.s32.totalorder %s107, %s108
      %p117 = scmp.eq.s32.totalorder %s24, 0
      %p118 = por %p116, %p117
      %p119 = scmp.ne.s32.totalorder %s107, %s108
      %p120 = scmp.eq.s32.totalorder %s25, 1
      %p121 = por %p119, %p120
      %p123 = scmp.ne.s32.totalorder %s108, %s122
      %p124 = scmp.eq.s32.totalorder %s25, 0
      %p125 = por %p123, %p124
      %s127 = sadd.s32 %s126, 1
      %p130 = scmp.eq.s32.totalorder %s19, 1
      %p131 = scmp.ne.s32.totalorder %s126, %s128
      %p132 = scmp.eq.s32.totalorder %s19, 0
      %p133 = por %p131, %p132
      %p134 = scmp.ne.s32.totalorder %s126, %s128
      %p135 = scmp.eq.s32.totalorder %s24, 1
      %p136 = por %p134, %p135
      %p137 = scmp.ne.s32.totalorder %s128, %s129
      %p138 = scmp.eq.s32.totalorder %s24, 0
      %p139 = por %p137, %p138
      %p140 = scmp.ne.s32.totalorder %s128, %s129
      %p141 = scmp.eq.s32.totalorder %s25, 1
      %p142 = por %p140, %p141
      %p144 = scmp.ne.s32.totalorder %s129, %s143
      %p145 = scmp.eq.s32.totalorder %s25, 0
      %p146 = por %p144, %p145
      %s148 = sadd.s32 %s147, 1
      %p151 = scmp.eq.s32.totalorder %s19, 1
      %p152 = scmp.ne.s32.totalorder %s147, %s149
      %p153 = scmp.eq.s32.totalorder %s19, 0
      %p154 = por %p152, %p153
      %p155 = scmp.ne.s32.totalorder %s147, %s149
      %p156 = scmp.eq.s32.totalorder %s24, 1
      %p157 = por %p155, %p156
      %p158 = scmp.ne.s32.totalorder %s149, %s150
      %p159 = scmp.eq.s32.totalorder %s24, 0
      %p160 = por %p158, %p159
      %p161 = scmp.ne.s32.totalorder %s149, %s150
      %p162 = scmp.eq.s32.totalorder %s25, 1
      %p163 = por %p161, %p162
      %p165 = scmp.ne.s32.totalorder %s150, %s164
      %p166 = scmp.eq.s32.totalorder %s25, 0
      %p167 = por %p165, %p166
      %p168 = scmp.le.s32.totalorder 1, %s19
      %p169 = scmp.lt.s32.totalorder %s19, 3
      %p170 = pnand %p168, %p169
      %p171 = pneg %p170
      // Predicated region
      $region9: #{tpu_custom_call.1} parent=5 // pred_check
        _
      $region10: #{tpu_custom_call.1} parent=5 // pred_check_branch
        %173 = sbr.rel (%p170) target = $region12
      $region11: #{tpu_custom_call.1} parent=5 // pred_region
        %s174 = ssub.s32 %s19, 1
        // Predicated region
        $region13: #{tpu_custom_call.1} parent=11 // pred_check
          %p175 = pneg %p118
        $region14: #{tpu_custom_call.1} parent=11 // pred_check_branch
          %177 = sbr.rel (%p175) target = $region16
        $region15: #{tpu_custom_call.1} parent=11 // pred_region
          %s179 = ssub.s32 2048, 2048
          %180 = vsyncadd [#allocation9], %s179
          %s181 = sshll.u32 [#allocation10], 4
          %s182 = int_to_ptr.vmem [resolvable:$true] %s181
          %187 = dma.hbm_to_vmem [thread:$0]  %s4, 2048, %s182, [#allocation9], 128, 128, 8
        $region16: #{tpu_custom_call.1} parent=11 // pred_fallthru
          _
        // Predicated region
        $region17: #{tpu_custom_call.1} parent=11 // pred_check
          %p188 = pneg %p139
        $region18: #{tpu_custom_call.1} parent=11 // pred_check_branch
          %190 = sbr.rel (%p188) target = $region20
        $region19: #{tpu_custom_call.1} parent=11 // pred_region
          _
        $region20: #{tpu_custom_call.1} parent=11 // pred_fallthru
          _
      $region12: #{tpu_custom_call.1} parent=5 // pred_fallthru
        _
      %p191 = scmp.lt.s32.totalorder %s19, 2
      // Predicated region
      $region21: #{tpu_custom_call.1} parent=5 // pred_check
        %p192 = pneg %p191
      $region22: #{tpu_custom_call.1} parent=5 // pred_check_branch
        %194 = sbr.rel (%p192) target = $region24
      $region23: #{tpu_custom_call.1} parent=5 // pred_region
        // Predicated region
        $region25: #{tpu_custom_call.1} parent=23 // pred_check
          %p195 = pneg %p39
        $region26: #{tpu_custom_call.1} parent=23 // pred_check_branch
          %197 = sbr.rel (%p195) target = $region28
        $region27: #{tpu_custom_call.1} parent=23 // pred_region
          %s198 = sand.u32 %s29, 1
          %s199 = scalar_lea.sflag [#allocation6], %s198
          %s200 = sand.u32 %s29, 1
          %s201 = smul.addr %s200, 256
          %s202 = scalar_lea.vmem [#allocation5], %s201
          %s204 = ssub.s32 4096, 4096
          %205 = vsyncadd %s199, %s204
          %s206 = smul.addr %s19, 64
          %s207 = smul.addr %s206, 64
          %s208 = scalar_lea.hbm %s1, %s207
          %s209 = sshll.u32 %s202, 4
          %s210 = int_to_ptr.vmem [resolvable:$true] %s209
          %215 = dma.hbm_to_vmem [thread:$0]  %s208, 4096, %s210, %s199, 256, 256, 16
        $region28: #{tpu_custom_call.1} parent=23 // pred_fallthru
          _
        // Predicated region
        $region29: #{tpu_custom_call.1} parent=23 // pred_check
          %p216 = pneg %p65
        $region30: #{tpu_custom_call.1} parent=23 // pred_check_branch
          %218 = sbr.rel (%p216) target = $region32
        $region31: #{tpu_custom_call.1} parent=23 // pred_region
          %s219 = sand.u32 %s19, 1
          %s220 = scalar_lea.sflag [#allocation9], %s219
          %s221 = sand.u32 %s55, 1
          %s222 = smul.addr %s221, 256
          %s223 = scalar_lea.vmem [#allocation8], %s222
          %s225 = ssub.s32 4096, 4096
          %226 = vsyncadd %s220, %s225
          %s227 = smul.addr %s19, 64
          %s228 = smul.addr %s227, 64
          %s229 = scalar_lea.hbm %s2, %s228
          %s230 = sshll.u32 %s223, 4
          %s231 = int_to_ptr.vmem [resolvable:$true] %s230
          %236 = dma.hbm_to_vmem [thread:$0]  %s229, 4096, %s231, %s220, 256, 256, 16
        $region32: #{tpu_custom_call.1} parent=23 // pred_fallthru
          _
        // Predicated region
        $region33: #{tpu_custom_call.1} parent=23 // pred_check
          %p237 = pneg %p91
        $region34: #{tpu_custom_call.1} parent=23 // pred_check_branch
          %239 = sbr.rel (%p237) target = $region36
        $region35: #{tpu_custom_call.1} parent=23 // pred_region
          %p240 = scmp.lt.s32.totalorder %s19, 1
          %s241 = scalar_select %p240, %s19, 1
          %s242 = smul.addr %s241, 4
          %s243 = scalar_lea.vmem %s3, %s242
        $region36: #{tpu_custom_call.1} parent=23 // pred_fallthru
          _
      $region24: #{tpu_custom_call.1} parent=5 // pred_fallthru
        _
      %p244 = scmp.le.s32.totalorder 1, %s19
      %p245 = scmp.lt.s32.totalorder %s19, 3
      %p246 = pnand %p244, %p245
      %p247 = pneg %p246
      // Predicated region
      $region37: #{tpu_custom_call.1} parent=5 // pred_check
        _
      $region38: #{tpu_custom_call.1} parent=5 // pred_check_branch
        %249 = sbr.rel (%p246) target = $region40
      $region39: #{tpu_custom_call.1} parent=5 // pred_region
        %s250 = ssub.s32 %s19, 1
        %s251 = sand.u32 %s32, 1
        %s252 = scalar_lea.sflag [#allocation6], %s251
        %s253 = sand.u32 %s32, 1
        %s254 = smul.addr %s253, 256
        %s255 = scalar_lea.vmem [#allocation5], %s254
        // Predicated region
        $region41: #{tpu_custom_call.1} parent=39 // pred_check
          %p256 = pneg %p45
        $region42: #{tpu_custom_call.1} parent=39 // pred_check_branch
          %258 = sbr.rel (%p256) target = $region44
        $region43: #{tpu_custom_call.1} parent=39 // pred_region
          %259 = dma.done %s252, 4096
        $region44: #{tpu_custom_call.1} parent=39 // pred_fallthru
          _
        %s260 = sand.u32 %s24, 1
        %s261 = scalar_lea.sflag [#allocation9], %s260
        %s262 = sand.u32 %s58, 1
        %s263 = smul.addr %s262, 256
        %s264 = scalar_lea.vmem [#allocation8], %s263
        // Predicated region
        $region45: #{tpu_custom_call.1} parent=39 // pred_check
          %p265 = pneg %p71
        $region46: #{tpu_custom_call.1} parent=39 // pred_check_branch
          %267 = sbr.rel (%p265) target = $region48
        $region47: #{tpu_custom_call.1} parent=39 // pred_region
          %268 = dma.done %s261, 4096
        $region48: #{tpu_custom_call.1} parent=39 // pred_fallthru
          _
        // Predicated region
        $region49: #{tpu_custom_call.1} parent=39 // pred_check
          %p269 = pneg %p118
        $region50: #{tpu_custom_call.1} parent=39 // pred_check_branch
          %271 = sbr.rel (%p269) target = $region52
        $region51: #{tpu_custom_call.1} parent=39 // pred_region
          %272 = dma.done [#allocation9], 2048
        $region52: #{tpu_custom_call.1} parent=39 // pred_fallthru
          _
        %s273 = sand.u32 %s32, 1
        %s274 = scalar_lea.sflag [#allocation6], %s273
        %s275 = sand.u32 %s32, 1
        %s276 = smul.addr %s275, 256
        %s277 = scalar_lea.vmem [#allocation5], %s276
        %p278 = pneg %p45
        %p279 = pneg %p42
        %s280 = sand.u32 %s24, 1
        %s281 = scalar_lea.sflag [#allocation9], %s280
        %s282 = sand.u32 %s58, 1
        %s283 = smul.addr %s282, 256
        %s284 = scalar_lea.vmem [#allocation8], %s283
        %p285 = pneg %p71
        %p286 = pneg %p68
        %p287 = scmp.lt.s32.totalorder %s24, 1
        %s288 = scalar_select %p287, %s24, 1
        %s289 = smul.addr %s288, 4
        %s290 = scalar_lea.vmem %s3, %s289
        %p291 = pneg %p97
        %p292 = pneg %p94
        %p293 = pneg %p118
        %p294 = pneg %p115
        %p295 = pneg %p139
        %p296 = pneg %p136
        %p297 = pneg %p160
        %p298 = pneg %p157
        %p299 = scmp.lt.s32.totalorder %s24, 1
        %s300 = scalar_select %p299, %s24, 1
        %s301 = smul.addr %s300, 4
        %s302 = scalar_lea.vmem %s3, %s301
        %p304 = scmp.eq.s32.totalorder %s24, 0
        // Predicated region
        $region53: #{tpu_custom_call.1} parent=39 // pred_check
          %p305 = pneg %p304
        $region54: #{tpu_custom_call.1} parent=39 // pred_check_branch
          %307 = sbr.rel (%p305) target = $region56
        $region55: #{tpu_custom_call.1} parent=39 // pred_region
          // Predicated region
          $region57: #{tpu_custom_call.1} parent=55 // pred_check
            _
          $region58: #{tpu_custom_call.1} parent=55 // pred_check_branch
            %309 = sbr.rel target = $region60
          $region59: #{tpu_custom_call.1} parent=55 // pred_region
            %310 = sst [smem:[#allocation14]] [#allocation13]
            %311 = sst [smem:[#allocation15]] [#allocation12]
          $region60: #{tpu_custom_call.1} parent=55 // pred_fallthru
            _
          %313 = shalt.err (0)
          %s315 = sshll.u32 [#allocation2], 4
          %s316 = int_to_ptr.vmem [resolvable:$true] %s315
          %318 = dma.hbm_to_vmem [thread:$0]  %s0, 1024, %s316, [#allocation4]
          %s319 = smul.u32 4, 16
          %s320 = smul.u32 %s319, 1
          %s321 = sshll.u32 %s320, 4
          %322 = dma.done [#allocation4], %s321
        $region56: #{tpu_custom_call.1} parent=39 // pred_fallthru
          _
        %v323 = vld [vmem:[%s255] sm:$0xff]
        %v324 = vld [vmem:[%s255 + $0x8] sm:$0xff]
        %v325 = vld [vmem:[%s255 + $0x10] sm:$0xff]
        %v326 = vld [vmem:[%s255 + $0x18] sm:$0xff]
        %v327 = vld [vmem:[%s255 + $0x20] sm:$0xff]
        %v328 = vld [vmem:[%s255 + $0x28] sm:$0xff]
        %v329 = vld [vmem:[%s255 + $0x30] sm:$0xff]
        %v330 = vld [vmem:[%s255 + $0x38] sm:$0xff]
        %v331 = vld [vmem:[%s255 + $0x40] sm:$0xff]
        %v332 = vld [vmem:[%s255 + $0x48] sm:$0xff]
        %v333 = vld [vmem:[%s255 + $0x50] sm:$0xff]
        %v334 = vld [vmem:[%s255 + $0x58] sm:$0xff]
        %v335 = vld [vmem:[%s255 + $0x60] sm:$0xff]
        %v336 = vld [vmem:[%s255 + $0x68] sm:$0xff]
        %v337 = vld [vmem:[%s255 + $0x70] sm:$0xff]
        %v338 = vld [vmem:[%s255 + $0x78] sm:$0xff]
        %v339 = vld [vmem:[%s255 + $0x80] sm:$0xff]
        %v340 = vld [vmem:[%s255 + $0x88] sm:$0xff]
        %v341 = vld [vmem:[%s255 + $0x90] sm:$0xff]
        %v342 = vld [vmem:[%s255 + $0x98] sm:$0xff]
        %v343 = vld [vmem:[%s255 + $0xa0] sm:$0xff]
        %v344 = vld [vmem:[%s255 + $0xa8] sm:$0xff]
        %v345 = vld [vmem:[%s255 + $0xb0] sm:$0xff]
        %v346 = vld [vmem:[%s255 + $0xb8] sm:$0xff]
        %v347 = vld [vmem:[%s255 + $0xc0] sm:$0xff]
        %v348 = vld [vmem:[%s255 + $0xc8] sm:$0xff]
        %v349 = vld [vmem:[%s255 + $0xd0] sm:$0xff]
        %v350 = vld [vmem:[%s255 + $0xd8] sm:$0xff]
        %v351 = vld [vmem:[%s255 + $0xe0] sm:$0xff]
        %v352 = vld [vmem:[%s255 + $0xe8] sm:$0xff]
        %v353 = vld [vmem:[%s255 + $0xf0] sm:$0xff]
        %v354 = vld [vmem:[%s255 + $0xf8] sm:$0xff]
        %v355 = vld [vmem:[%s264] sm:$0xff]
        %v356 = vld [vmem:[%s264 + $0x8] sm:$0xff]
        %v357 = vld [vmem:[%s264 + $0x10] sm:$0xff]
        %v358 = vld [vmem:[%s264 + $0x18] sm:$0xff]
        %v359 = vld [vmem:[%s264 + $0x20] sm:$0xff]
        %v360 = vld [vmem:[%s264 + $0x28] sm:$0xff]
        %v361 = vld [vmem:[%s264 + $0x30] sm:$0xff]
        %v362 = vld [vmem:[%s264 + $0x38] sm:$0xff]
        %v363 = vld [vmem:[%s264 + $0x40] sm:$0xff]
        %v364 = vld [vmem:[%s264 + $0x48] sm:$0xff]
        %v365 = vld [vmem:[%s264 + $0x50] sm:$0xff]
        %v366 = vld [vmem:[%s264 + $0x58] sm:$0xff]
        %v367 = vld [vmem:[%s264 + $0x60] sm:$0xff]
        %v368 = vld [vmem:[%s264 + $0x68] sm:$0xff]
        %v369 = vld [vmem:[%s264 + $0x70] sm:$0xff]
        %v370 = vld [vmem:[%s264 + $0x78] sm:$0xff]
        %v371 = vld [vmem:[%s264 + $0x80] sm:$0xff]
        %v372 = vld [vmem:[%s264 + $0x88] sm:$0xff]
        %v373 = vld [vmem:[%s264 + $0x90] sm:$0xff]
        %v374 = vld [vmem:[%s264 + $0x98] sm:$0xff]
        %v375 = vld [vmem:[%s264 + $0xa0] sm:$0xff]
        %v376 = vld [vmem:[%s264 + $0xa8] sm:$0xff]
        %v377 = vld [vmem:[%s264 + $0xb0] sm:$0xff]
        %v378 = vld [vmem:[%s264 + $0xb8] sm:$0xff]
        %v379 = vld [vmem:[%s264 + $0xc0] sm:$0xff]
        %v380 = vld [vmem:[%s264 + $0xc8] sm:$0xff]
        %v381 = vld [vmem:[%s264 + $0xd0] sm:$0xff]
        %v382 = vld [vmem:[%s264 + $0xd8] sm:$0xff]
        %v383 = vld [vmem:[%s264 + $0xe0] sm:$0xff]
        %v384 = vld [vmem:[%s264 + $0xe8] sm:$0xff]
        %v385 = vld [vmem:[%s264 + $0xf0] sm:$0xff]
        %v386 = vld [vmem:[%s264 + $0xf8] sm:$0xff]
        %v387 = vld [vmem:[%s302] sm:$0xf]
        %v388 = vld [vmem:[#allocation2] sm:$0xff]
        %v389 = vld [vmem:[#allocation2 + $0x8] sm:$0xff]
        %v390 = vld [vmem:[#allocation2 + $0x10] sm:$0xff]
        %v391 = vld [vmem:[#allocation2 + $0x18] sm:$0xff]
        %v392 = vld [vmem:[#allocation2 + $0x20] sm:$0xff]
        %v393 = vld [vmem:[#allocation2 + $0x28] sm:$0xff]
        %v394 = vld [vmem:[#allocation2 + $0x30] sm:$0xff]
        %v395 = vld [vmem:[#allocation2 + $0x38] sm:$0xff]
        %v397 = vlaneseq
        %v398 = vshrl.u32 %v397, 7
        %v399 = vsub.s32 0, %v398
        %v400 = vrot.slane %v387, %v399
        %v401 = vlaneseq
        %v402 = vshrl.u32 %v401, 7
        %v403 = vsub.s32 1, %v402
        %v404 = vrot.slane %v387, %v403
        %v405 = vlaneseq
        %v406 = vshrl.u32 %v405, 7
        %v407 = vsub.s32 2, %v406
        %v408 = vrot.slane %v387, %v407
        %v409 = vlaneseq
        %v410 = vshrl.u32 %v409, 7
        %v411 = vsub.s32 3, %v410
        %v412 = vrot.slane %v387, %v411
        %v449 = vunpack.c.l.b16 %v323
        %v450 = vunpack.c.h.b16 %v323
        %v451 = vunpack.c.l.b16 %v324
        %v452 = vunpack.c.h.b16 %v324
        %v453 = vunpack.c.l.b16 %v325
        %v454 = vunpack.c.h.b16 %v325
        %v455 = vunpack.c.l.b16 %v326
        %v456 = vunpack.c.h.b16 %v326
        %v457 = vunpack.c.l.b16 %v327
        %v458 = vunpack.c.h.b16 %v327
        %v459 = vunpack.c.l.b16 %v328
        %v460 = vunpack.c.h.b16 %v328
        %v461 = vunpack.c.l.b16 %v329
        %v462 = vunpack.c.h.b16 %v329
        %v463 = vunpack.c.l.b16 %v330
        %v464 = vunpack.c.h.b16 %v330
        %v465 = vunpack.c.l.b16 %v331
        %v466 = vunpack.c.h.b16 %v331
        %v467 = vunpack.c.l.b16 %v332
        %v468 = vunpack.c.h.b16 %v332
        %v469 = vunpack.c.l.b16 %v333
        %v470 = vunpack.c.h.b16 %v333
        %v471 = vunpack.c.l.b16 %v334
        %v472 = vunpack.c.h.b16 %v334
        %v473 = vunpack.c.l.b16 %v335
        %v474 = vunpack.c.h.b16 %v335
        %v475 = vunpack.c.l.b16 %v336
        %v476 = vunpack.c.h.b16 %v336
        %v477 = vunpack.c.l.b16 %v337
        %v478 = vunpack.c.h.b16 %v337
        %v479 = vunpack.c.l.b16 %v338
        %v480 = vunpack.c.h.b16 %v338
        %v481 = vunpack.c.l.b16 %v339
        %v482 = vunpack.c.h.b16 %v339
        %v483 = vunpack.c.l.b16 %v340
        %v484 = vunpack.c.h.b16 %v340
        %v485 = vunpack.c.l.b16 %v341
        %v486 = vunpack.c.h.b16 %v341
        %v487 = vunpack.c.l.b16 %v342
        %v488 = vunpack.c.h.b16 %v342
        %v489 = vunpack.c.l.b16 %v343
        %v490 = vunpack.c.h.b16 %v343
        %v491 = vunpack.c.l.b16 %v344
        %v492 = vunpack.c.h.b16 %v344
        %v493 = vunpack.c.l.b16 %v345
        %v494 = vunpack.c.h.b16 %v345
        %v495 = vunpack.c.l.b16 %v346
        %v496 = vunpack.c.h.b16 %v346
        %v497 = vunpack.c.l.b16 %v347
        %v498 = vunpack.c.h.b16 %v347
        %v499 = vunpack.c.l.b16 %v348
        %v500 = vunpack.c.h.b16 %v348
        %v501 = vunpack.c.l.b16 %v349
        %v502 = vunpack.c.h.b16 %v349
        %v503 = vunpack.c.l.b16 %v350
        %v504 = vunpack.c.h.b16 %v350
        %v505 = vunpack.c.l.b16 %v351
        %v506 = vunpack.c.h.b16 %v351
        %v507 = vunpack.c.l.b16 %v352
        %v508 = vunpack.c.h.b16 %v352
        %v509 = vunpack.c.l.b16 %v353
        %v510 = vunpack.c.h.b16 %v353
        %v511 = vunpack.c.l.b16 %v354
        %v512 = vunpack.c.h.b16 %v354
        %v513 = vpack.c.b16 %v453, %v449
        %v514 = vpack.c.b16 %v454, %v450
        %v515 = vpack.c.b16 %v455, %v451
        %v516 = vpack.c.b16 %v456, %v452
        %v517 = vpack.c.b16 %v461, %v457
        %v518 = vpack.c.b16 %v462, %v458
        %v519 = vpack.c.b16 %v463, %v459
        %v520 = vpack.c.b16 %v464, %v460
        %v521 = vpack.c.b16 %v469, %v465
        %v522 = vpack.c.b16 %v470, %v466
        %v523 = vpack.c.b16 %v471, %v467
        %v524 = vpack.c.b16 %v472, %v468
        %v525 = vpack.c.b16 %v477, %v473
        %v526 = vpack.c.b16 %v478, %v474
        %v527 = vpack.c.b16 %v479, %v475
        %v528 = vpack.c.b16 %v480, %v476
        %v529 = vpack.c.b16 %v485, %v481
        %v530 = vpack.c.b16 %v486, %v482
        %v531 = vpack.c.b16 %v487, %v483
        %v532 = vpack.c.b16 %v488, %v484
        %v533 = vpack.c.b16 %v493, %v489
        %v534 = vpack.c.b16 %v494, %v490
        %v535 = vpack.c.b16 %v495, %v491
        %v536 = vpack.c.b16 %v496, %v492
        %v537 = vpack.c.b16 %v501, %v497
        %v538 = vpack.c.b16 %v502, %v498
        %v539 = vpack.c.b16 %v503, %v499
        %v540 = vpack.c.b16 %v504, %v500
        %v541 = vpack.c.b16 %v509, %v505
        %v542 = vpack.c.b16 %v510, %v506
        %v543 = vpack.c.b16 %v511, %v507
        %v544 = vpack.c.b16 %v512, %v508
        %577 = vmatprep.subr.bf16.mxu0 %v514
        %578 = vmatpush1.bf16.msra.mxu0 %v513
        %579 = vmatprep.subr.bf16.mxu0 %v518
        %580 = vmatpush1.bf16.msra.mxu0 %v517
        %581 = vmatprep.subr.bf16.mxu0 %v522
        %582 = vmatpush1.bf16.msra.mxu0 %v521
        %583 = vmatprep.subr.bf16.mxu0 %v526
        %584 = vmatpush1.bf16.msra.mxu0 %v525
        %585 = vmatprep.subr.bf16.mxu0 %v530
        %586 = vmatpush1.bf16.msra.mxu0 %v529
        %587 = vmatprep.subr.bf16.mxu0 %v534
        %588 = vmatpush1.bf16.msra.mxu0 %v533
        %589 = vmatprep.subr.bf16.mxu0 %v538
        %590 = vmatpush1.bf16.msra.mxu0 %v537
        %591 = vmatprep.subr.bf16.mxu0 %v542
        %592 = vmatpush1.bf16.msra.mxu0 %v541
        %593 = vmatprep.subr.bf16.mxu0 0
        %594 = vmatpush1.bf16.msra.mxu0 0
        %595 = vmatprep.subr.bf16.mxu0 0
        %596 = vmatpush1.bf16.msra.mxu0 0
        %597 = vmatprep.subr.bf16.mxu0 0
        %598 = vmatpush1.bf16.msra.mxu0 0
        %599 = vmatprep.subr.bf16.mxu0 0
        %600 = vmatpush1.bf16.msra.mxu0 0
        %601 = vmatprep.subr.bf16.mxu0 0
        %602 = vmatpush1.bf16.msra.mxu0 0
        %603 = vmatprep.subr.bf16.mxu0 0
        %604 = vmatpush1.bf16.msra.mxu0 0
        %605 = vmatprep.subr.bf16.mxu0 0
        %606 = vmatpush1.bf16.msra.mxu0 0
        %607 = vmatprep.subr.bf16.mxu0 0
        %608 = vmatpush1.bf16.msra.mxu0 0
        %609 = vmatprep.mubr.bf16.mxu0 0
        %610 = vmatmul.mubr.bf16.gmra.mrb[0].mxu0 %v388
        %v611 = vpop.f32.mrb[0].mxu0
        %v612 = vadd.f32 %v400, %v611
        %v613 = vpop.f32.mrb[0].mxu0
        %v614 = vadd.f32 %v404, %v613
        %v615 = vpop.f32.mrb[0].mxu0
        %v616 = vadd.f32 %v400, %v615
        %v617 = vpop.f32.mrb[0].mxu0
        %v618 = vadd.f32 %v404, %v617
        %619 = vmatprep.mubr.bf16.mxu0 0
        %620 = vmatmul.mubr.bf16.gmra.mrb[0].mxu0 %v389
        %v621 = vpop.f32.mrb[0].mxu0
        %v622 = vadd.f32 %v400, %v621
        %v623 = vpop.f32.mrb[0].mxu0
        %v624 = vadd.f32 %v404, %v623
        %v625 = vpop.f32.mrb[0].mxu0
        %v626 = vadd.f32 %v400, %v625
        %v627 = vpop.f32.mrb[0].mxu0
        %v628 = vadd.f32 %v404, %v627
        %629 = vmatprep.mubr.bf16.mxu0 0
        %630 = vmatmul.mubr.bf16.gmra.mrb[0].mxu0 %v390
        %v631 = vpop.f32.mrb[0].mxu0
        %v632 = vadd.f32 %v400, %v631
        %v633 = vpop.f32.mrb[0].mxu0
        %v634 = vadd.f32 %v404, %v633
        %v635 = vpop.f32.mrb[0].mxu0
        %v636 = vadd.f32 %v400, %v635
        %v637 = vpop.f32.mrb[0].mxu0
        %v638 = vadd.f32 %v404, %v637
        %639 = vmatprep.mubr.bf16.mxu0 0
        %640 = vmatmul.mubr.bf16.gmra.mrb[0].mxu0 %v391
        %v641 = vpop.f32.mrb[0].mxu0
        %v642 = vadd.f32 %v400, %v641
        %v643 = vpop.f32.mrb[0].mxu0
        %v644 = vadd.f32 %v404, %v643
        %v645 = vpop.f32.mrb[0].mxu0
        %v646 = vadd.f32 %v400, %v645
        %v647 = vpop.f32.mrb[0].mxu0
        %v648 = vadd.f32 %v404, %v647
        %649 = vmatprep.mubr.bf16.mxu0 0
        %650 = vmatmul.mubr.bf16.gmra.mrb[0].mxu0 %v392
        %v651 = vpop.f32.mrb[0].mxu0
        %v652 = vadd.f32 %v400, %v651
        %v653 = vpop.f32.mrb[0].mxu0
        %v654 = vadd.f32 %v404, %v653
        %v655 = vpop.f32.mrb[0].mxu0
        %v656 = vadd.f32 %v400, %v655
        %v657 = vpop.f32.mrb[0].mxu0
        %v658 = vadd.f32 %v404, %v657
        %659 = vmatprep.mubr.bf16.mxu0 0
        %660 = vmatmul.mubr.bf16.gmra.mrb[0].mxu0 %v393
        %v661 = vpop.f32.mrb[0].mxu0
        %v662 = vadd.f32 %v400, %v661
        %v663 = vpop.f32.mrb[0].mxu0
        %v664 = vadd.f32 %v404, %v663
        %v665 = vpop.f32.mrb[0].mxu0
        %v666 = vadd.f32 %v400, %v665
        %v667 = vpop.f32.mrb[0].mxu0
        %v668 = vadd.f32 %v404, %v667
        %669 = vmatprep.mubr.bf16.mxu0 0
        %670 = vmatmul.mubr.bf16.gmra.mrb[0].mxu0 %v394
        %v671 = vpop.f32.mrb[0].mxu0
        %v672 = vadd.f32 %v400, %v671
        %v673 = vpop.f32.mrb[0].mxu0
        %v674 = vadd.f32 %v404, %v673
        %v675 = vpop.f32.mrb[0].mxu0
        %v676 = vadd.f32 %v400, %v675
        %v677 = vpop.f32.mrb[0].mxu0
        %v678 = vadd.f32 %v404, %v677
        %679 = vmatprep.mubr.bf16.mxu0 0
        %680 = vmatmul.mubr.bf16.gmra.mrb[0].mxu0 %v395
        %v681 = vpop.f32.mrb[0].mxu0
        %v682 = vadd.f32 %v400, %v681
        %v683 = vpop.f32.mrb[0].mxu0
        %v684 = vadd.f32 %v404, %v683
        %v685 = vpop.f32.mrb[0].mxu0
        %v686 = vadd.f32 %v400, %v685
        %v687 = vpop.f32.mrb[0].mxu0
        %v688 = vadd.f32 %v404, %v687
        %689 = vdwg.mxu0
        %690 = vmatprep.subr.bf16.mxu0 %v516
        %691 = vmatpush1.bf16.msra.mxu0 %v515
        %692 = vmatprep.subr.bf16.mxu0 %v520
        %693 = vmatpush1.bf16.msra.mxu0 %v519
        %694 = vmatprep.subr.bf16.mxu0 %v524
        %695 = vmatpush1.bf16.msra.mxu0 %v523
        %696 = vmatprep.subr.bf16.mxu0 %v528
        %697 = vmatpush1.bf16.msra.mxu0 %v527
        %698 = vmatprep.subr.bf16.mxu0 %v532
        %699 = vmatpush1.bf16.msra.mxu0 %v531
        %700 = vmatprep.subr.bf16.mxu0 %v536
        %701 = vmatpush1.bf16.msra.mxu0 %v535
        %702 = vmatprep.subr.bf16.mxu0 %v540
        %703 = vmatpush1.bf16.msra.mxu0 %v539
        %704 = vmatprep.subr.bf16.mxu0 %v544
        %705 = vmatpush1.bf16.msra.mxu0 %v543
        %706 = vmatprep.subr.bf16.mxu0 0
        %707 = vmatpush1.bf16.msra.mxu0 0
        %708 = vmatprep.subr.bf16.mxu0 0
        %709 = vmatpush1.bf16.msra.mxu0 0
        %710 = vmatprep.subr.bf16.mxu0 0
        %711 = vmatpush1.bf16.msra.mxu0 0
        %712 = vmatprep.subr.bf16.mxu0 0
        %713 = vmatpush1.bf16.msra.mxu0 0
        %714 = vmatprep.subr.bf16.mxu0 0
        %715 = vmatpush1.bf16.msra.mxu0 0
        %716 = vmatprep.subr.bf16.mxu0 0
        %717 = vmatpush1.bf16.msra.mxu0 0
        %718 = vmatprep.subr.bf16.mxu0 0
        %719 = vmatpush1.bf16.msra.mxu0 0
        %720 = vmatprep.subr.bf16.mxu0 0
        %721 = vmatpush1.bf16.msra.mxu0 0
        %722 = vmatprep.mubr.bf16.mxu0 0
        %723 = vmatmul.mubr.bf16.gmra.mrb[0].mxu0 %v388
        %v724 = vpop.f32.mrb[0].mxu0
        %v725 = vadd.f32 %v408, %v724
        %v726 = vpop.f32.mrb[0].mxu0
        %v727 = vadd.f32 %v412, %v726
        %v728 = vpop.f32.mrb[0].mxu0
        %v729 = vadd.f32 %v408, %v728
        %v730 = vpop.f32.mrb[0].mxu0
        %v731 = vadd.f32 %v412, %v730
        %732 = vmatprep.mubr.bf16.mxu0 0
        %733 = vmatmul.mubr.bf16.gmra.mrb[0].mxu0 %v389
        %v734 = vpop.f32.mrb[0].mxu0
        %v735 = vadd.f32 %v408, %v734
        %v736 = vpop.f32.mrb[0].mxu0
        %v737 = vadd.f32 %v412, %v736
        %v738 = vpop.f32.mrb[0].mxu0
        %v739 = vadd.f32 %v408, %v738
        %v740 = vpop.f32.mrb[0].mxu0
        %v741 = vadd.f32 %v412, %v740
        %742 = vmatprep.mubr.bf16.mxu0 0
        %743 = vmatmul.mubr.bf16.gmra.mrb[0].mxu0 %v390
        %v744 = vpop.f32.mrb[0].mxu0
        %v745 = vadd.f32 %v408, %v744
        %v746 = vpop.f32.mrb[0].mxu0
        %v747 = vadd.f32 %v412, %v746
        %v748 = vpop.f32.mrb[0].mxu0
        %v749 = vadd.f32 %v408, %v748
        %v750 = vpop.f32.mrb[0].mxu0
        %v751 = vadd.f32 %v412, %v750
        %752 = vmatprep.mubr.bf16.mxu0 0
        %753 = vmatmul.mubr.bf16.gmra.mrb[0].mxu0 %v391
        %v754 = vpop.f32.mrb[0].mxu0
        %v755 = vadd.f32 %v408, %v754
        %v756 = vpop.f32.mrb[0].mxu0
        %v757 = vadd.f32 %v412, %v756
        %v758 = vpop.f32.mrb[0].mxu0
        %v759 = vadd.f32 %v408, %v758
        %v760 = vpop.f32.mrb[0].mxu0
        %v761 = vadd.f32 %v412, %v760
        %762 = vmatprep.mubr.bf16.mxu0 0
        %763 = vmatmul.mubr.bf16.gmra.mrb[0].mxu0 %v392
        %v764 = vpop.f32.mrb[0].mxu0
        %v765 = vadd.f32 %v408, %v764
        %v766 = vpop.f32.mrb[0].mxu0
        %v767 = vadd.f32 %v412, %v766
        %v768 = vpop.f32.mrb[0].mxu0
        %v769 = vadd.f32 %v408, %v768
        %v770 = vpop.f32.mrb[0].mxu0
        %v771 = vadd.f32 %v412, %v770
        %772 = vmatprep.mubr.bf16.mxu0 0
        %773 = vmatmul.mubr.bf16.gmra.mrb[0].mxu0 %v393
        %v774 = vpop.f32.mrb[0].mxu0
        %v775 = vadd.f32 %v408, %v774
        %v776 = vpop.f32.mrb[0].mxu0
        %v777 = vadd.f32 %v412, %v776
        %v778 = vpop.f32.mrb[0].mxu0
        %v779 = vadd.f32 %v408, %v778
        %v780 = vpop.f32.mrb[0].mxu0
        %v781 = vadd.f32 %v412, %v780
        %782 = vmatprep.mubr.bf16.mxu0 0
        %783 = vmatmul.mubr.bf16.gmra.mrb[0].mxu0 %v394
        %v784 = vpop.f32.mrb[0].mxu0
        %v785 = vadd.f32 %v408, %v784
        %v786 = vpop.f32.mrb[0].mxu0
        %v787 = vadd.f32 %v412, %v786
        %v788 = vpop.f32.mrb[0].mxu0
        %v789 = vadd.f32 %v408, %v788
        %v790 = vpop.f32.mrb[0].mxu0
        %v791 = vadd.f32 %v412, %v790
        %792 = vmatprep.mubr.bf16.mxu0 0
        %793 = vmatmul.mubr.bf16.gmra.mrb[0].mxu0 %v395
        %v794 = vpop.f32.mrb[0].mxu0
        %v795 = vadd.f32 %v408, %v794
        %v796 = vpop.f32.mrb[0].mxu0
        %v797 = vadd.f32 %v412, %v796
        %v798 = vpop.f32.mrb[0].mxu0
        %v799 = vadd.f32 %v408, %v798
        %v800 = vpop.f32.mrb[0].mxu0
        %v801 = vadd.f32 %v412, %v800
        %802 = vdwg.mxu0
        %803 = vst [vmem:[#allocation3] sm:$0xff] %v612
        %804 = vst [vmem:[#allocation3 + $0x8] sm:$0xff] %v614
        %805 = vst [vmem:[#allocation3 + $0x10] sm:$0xff] %v725
        %806 = vst [vmem:[#allocation3 + $0x18] sm:$0xff] %v727
        %807 = vst [vmem:[#allocation3 + $0x20] sm:$0xff] %v616
        %808 = vst [vmem:[#allocation3 + $0x28] sm:$0xff] %v618
        %809 = vst [vmem:[#allocation3 + $0x30] sm:$0xff] %v729
        %810 = vst [vmem:[#allocation3 + $0x38] sm:$0xff] %v731
        %811 = vst [vmem:[#allocation3 + $0x40] sm:$0xff] %v622
        %812 = vst [vmem:[#allocation3 + $0x48] sm:$0xff] %v624
        %813 = vst [vmem:[#allocation3 + $0x50] sm:$0xff] %v735
        %814 = vst [vmem:[#allocation3 + $0x58] sm:$0xff] %v737
        %815 = vst [vmem:[#allocation3 + $0x60] sm:$0xff] %v626
        %816 = vst [vmem:[#allocation3 + $0x68] sm:$0xff] %v628
        %817 = vst [vmem:[#allocation3 + $0x70] sm:$0xff] %v739
        %818 = vst [vmem:[#allocation3 + $0x78] sm:$0xff] %v741
        %819 = vst [vmem:[#allocation3 + $0x80] sm:$0xff] %v632
        %820 = vst [vmem:[#allocation3 + $0x88] sm:$0xff] %v634
        %821 = vst [vmem:[#allocation3 + $0x90] sm:$0xff] %v745
        %822 = vst [vmem:[#allocation3 + $0x98] sm:$0xff] %v747
        %823 = vst [vmem:[#allocation3 + $0xa0] sm:$0xff] %v636
        %824 = vst [vmem:[#allocation3 + $0xa8] sm:$0xff] %v638
        %825 = vst [vmem:[#allocation3 + $0xb0] sm:$0xff] %v749
        %826 = vst [vmem:[#allocation3 + $0xb8] sm:$0xff] %v751
        %827 = vst [vmem:[#allocation3 + $0xc0] sm:$0xff] %v642
        %828 = vst [vmem:[#allocation3 + $0xc8] sm:$0xff] %v644
        %829 = vst [vmem:[#allocation3 + $0xd0] sm:$0xff] %v755
        %830 = vst [vmem:[#allocation3 + $0xd8] sm:$0xff] %v757
        %831 = vst [vmem:[#allocation3 + $0xe0] sm:$0xff] %v646
        %832 = vst [vmem:[#allocation3 + $0xe8] sm:$0xff] %v648
        %833 = vst [vmem:[#allocation3 + $0xf0] sm:$0xff] %v759
        %834 = vst [vmem:[#allocation3 + $0xf8] sm:$0xff] %v761
        %835 = vst [vmem:[#allocation3 + $0x100] sm:$0xff] %v652
        %836 = vst [vmem:[#allocation3 + $0x108] sm:$0xff] %v654
        %837 = vst [vmem:[#allocation3 + $0x110] sm:$0xff] %v765
        %838 = vst [vmem:[#allocation3 + $0x118] sm:$0xff] %v767
        %839 = vst [vmem:[#allocation3 + $0x120] sm:$0xff] %v656
        %840 = vst [vmem:[#allocation3 + $0x128] sm:$0xff] %v658
        %841 = vst [vmem:[#allocation3 + $0x130] sm:$0xff] %v769
        %842 = vst [vmem:[#allocation3 + $0x138] sm:$0xff] %v771
        %843 = vst [vmem:[#allocation3 + $0x140] sm:$0xff] %v662
        %844 = vst [vmem:[#allocation3 + $0x148] sm:$0xff] %v664
        %845 = vst [vmem:[#allocation3 + $0x150] sm:$0xff] %v775
        %846 = vst [vmem:[#allocation3 + $0x158] sm:$0xff] %v777
        %847 = vst [vmem:[#allocation3 + $0x160] sm:$0xff] %v666
        %848 = vst [vmem:[#allocation3 + $0x168] sm:$0xff] %v668
        %849 = vst [vmem:[#allocation3 + $0x170] sm:$0xff] %v779
        %850 = vst [vmem:[#allocation3 + $0x178] sm:$0xff] %v781
        %851 = vst [vmem:[#allocation3 + $0x180] sm:$0xff] %v672
        %852 = vst [vmem:[#allocation3 + $0x188] sm:$0xff] %v674
        %853 = vst [vmem:[#allocation3 + $0x190] sm:$0xff] %v785
        %854 = vst [vmem:[#allocation3 + $0x198] sm:$0xff] %v787
        %855 = vst [vmem:[#allocation3 + $0x1a0] sm:$0xff] %v676
        %856 = vst [vmem:[#allocation3 + $0x1a8] sm:$0xff] %v678
        %857 = vst [vmem:[#allocation3 + $0x1b0] sm:$0xff] %v789
        %858 = vst [vmem:[#allocation3 + $0x1b8] sm:$0xff] %v791
        %859 = vst [vmem:[#allocation3 + $0x1c0] sm:$0xff] %v682
        %860 = vst [vmem:[#allocation3 + $0x1c8] sm:$0xff] %v684
        %861 = vst [vmem:[#allocation3 + $0x1d0] sm:$0xff] %v795
        %862 = vst [vmem:[#allocation3 + $0x1d8] sm:$0xff] %v797
        %863 = vst [vmem:[#allocation3 + $0x1e0] sm:$0xff] %v686
        %864 = vst [vmem:[#allocation3 + $0x1e8] sm:$0xff] %v688
        %865 = vst [vmem:[#allocation3 + $0x1f0] sm:$0xff] %v799
        %866 = vst [vmem:[#allocation3 + $0x1f8] sm:$0xff] %v801
        %s867 = smul.u32 0, 4
        %s868 = smul.addr %s867, 8
        %s869 = scalar_lea.vmem [#allocation3], %s868
        %v870 = vld [vmem:[%s869] sm:$0xff]
        %v871 = vld [vmem:[%s869 + $0x8] sm:$0xff]
        %v872 = vld [vmem:[%s869 + $0x10] sm:$0xff]
        %v873 = vld [vmem:[%s869 + $0x18] sm:$0xff]
        %v874 = vld [vmem:[%s869 + $0x20] sm:$0xff]
        %v875 = vld [vmem:[%s869 + $0x28] sm:$0xff]
        %v876 = vld [vmem:[%s869 + $0x30] sm:$0xff]
        %v877 = vld [vmem:[%s869 + $0x38] sm:$0xff]
        %v910 = vunpack.c.l.b16 %v355
        %v911 = vunpack.c.h.b16 %v355
        %v912 = vunpack.c.l.b16 %v356
        %v913 = vunpack.c.h.b16 %v356
        %v914 = vunpack.c.l.b16 %v357
        %v915 = vunpack.c.h.b16 %v357
        %v916 = vunpack.c.l.b16 %v358
        %v917 = vunpack.c.h.b16 %v358
        %v918 = vunpack.c.l.b16 %v359
        %v919 = vunpack.c.h.b16 %v359
        %v920 = vunpack.c.l.b16 %v360
        %v921 = vunpack.c.h.b16 %v360
        %v922 = vunpack.c.l.b16 %v361
        %v923 = vunpack.c.h.b16 %v361
        %v924 = vunpack.c.l.b16 %v362
        %v925 = vunpack.c.h.b16 %v362
        %v926 = vunpack.c.l.b16 %v363
        %v927 = vunpack.c.h.b16 %v363
        %v928 = vunpack.c.l.b16 %v364
        %v929 = vunpack.c.h.b16 %v364
        %v930 = vunpack.c.l.b16 %v365
        %v931 = vunpack.c.h.b16 %v365
        %v932 = vunpack.c.l.b16 %v366
        %v933 = vunpack.c.h.b16 %v366
        %v934 = vunpack.c.l.b16 %v367
        %v935 = vunpack.c.h.b16 %v367
        %v936 = vunpack.c.l.b16 %v368
        %v937 = vunpack.c.h.b16 %v368
        %v938 = vunpack.c.l.b16 %v369
        %v939 = vunpack.c.h.b16 %v369
        %v940 = vunpack.c.l.b16 %v370
        %v941 = vunpack.c.h.b16 %v370
        %v942 = vunpack.c.l.b16 %v371
        %v943 = vunpack.c.h.b16 %v371
        %v944 = vunpack.c.l.b16 %v372
        %v945 = vunpack.c.h.b16 %v372
        %v946 = vunpack.c.l.b16 %v373
        %v947 = vunpack.c.h.b16 %v373
        %v948 = vunpack.c.l.b16 %v374
        %v949 = vunpack.c.h.b16 %v374
        %v950 = vunpack.c.l.b16 %v375
        %v951 = vunpack.c.h.b16 %v375
        %v952 = vunpack.c.l.b16 %v376
        %v953 = vunpack.c.h.b16 %v376
        %v954 = vunpack.c.l.b16 %v377
        %v955 = vunpack.c.h.b16 %v377
        %v956 = vunpack.c.l.b16 %v378
        %v957 = vunpack.c.h.b16 %v378
        %v958 = vunpack.c.l.b16 %v379
        %v959 = vunpack.c.h.b16 %v379
        %v960 = vunpack.c.l.b16 %v380
        %v961 = vunpack.c.h.b16 %v380
        %v962 = vunpack.c.l.b16 %v381
        %v963 = vunpack.c.h.b16 %v381
        %v964 = vunpack.c.l.b16 %v382
        %v965 = vunpack.c.h.b16 %v382
        %v966 = vunpack.c.l.b16 %v383
        %v967 = vunpack.c.h.b16 %v383
        %v968 = vunpack.c.l.b16 %v384
        %v969 = vunpack.c.h.b16 %v384
        %v970 = vunpack.c.l.b16 %v385
        %v971 = vunpack.c.h.b16 %v385
        %v972 = vunpack.c.l.b16 %v386
        %v973 = vunpack.c.h.b16 %v386
        %v974 = vpack.c.b16 %v914, %v910
        %v975 = vpack.c.b16 %v915, %v911
        %v976 = vpack.c.b16 %v916, %v912
        %v977 = vpack.c.b16 %v917, %v913
        %v978 = vpack.c.b16 %v922, %v918
        %v979 = vpack.c.b16 %v923, %v919
        %v980 = vpack.c.b16 %v924, %v920
        %v981 = vpack.c.b16 %v925, %v921
        %v982 = vpack.c.b16 %v930, %v926
        %v983 = vpack.c.b16 %v931, %v927
        %v984 = vpack.c.b16 %v932, %v928
        %v985 = vpack.c.b16 %v933, %v929
        %v986 = vpack.c.b16 %v938, %v934
        %v987 = vpack.c.b16 %v939, %v935
        %v988 = vpack.c.b16 %v940, %v936
        %v989 = vpack.c.b16 %v941, %v937
        %v990 = vpack.c.b16 %v946, %v942
        %v991 = vpack.c.b16 %v947, %v943
        %v992 = vpack.c.b16 %v948, %v944
        %v993 = vpack.c.b16 %v949, %v945
        %v994 = vpack.c.b16 %v954, %v950
        %v995 = vpack.c.b16 %v955, %v951
        %v996 = vpack.c.b16 %v956, %v952
        %v997 = vpack.c.b16 %v957, %v953
        %v998 = vpack.c.b16 %v962, %v958
        %v999 = vpack.c.b16 %v963, %v959
        %v1000 = vpack.c.b16 %v964, %v960
        %v1001 = vpack.c.b16 %v965, %v961
        %v1002 = vpack.c.b16 %v970, %v966
        %v1003 = vpack.c.b16 %v971, %v967
        %v1004 = vpack.c.b16 %v972, %v968
        %v1005 = vpack.c.b16 %v973, %v969
        %1038 = vmatprep.subr.bf16.mxu0 %v975
        %1039 = vmatpush1.bf16.msra.mxu0 %v974
        %1040 = vmatprep.subr.bf16.mxu0 %v979
        %1041 = vmatpush1.bf16.msra.mxu0 %v978
        %1042 = vmatprep.subr.bf16.mxu0 %v983
        %1043 = vmatpush1.bf16.msra.mxu0 %v982
        %1044 = vmatprep.subr.bf16.mxu0 %v987
        %1045 = vmatpush1.bf16.msra.mxu0 %v986
        %1046 = vmatprep.subr.bf16.mxu0 %v991
        %1047 = vmatpush1.bf16.msra.mxu0 %v990
        %1048 = vmatprep.subr.bf16.mxu0 %v995
        %1049 = vmatpush1.bf16.msra.mxu0 %v994
        %1050 = vmatprep.subr.bf16.mxu0 %v999
        %1051 = vmatpush1.bf16.msra.mxu0 %v998
        %1052 = vmatprep.subr.bf16.mxu0 %v1003
        %1053 = vmatpush1.bf16.msra.mxu0 %v1002
        %1054 = vmatprep.subr.bf16.mxu0 0
        %1055 = vmatpush1.bf16.msra.mxu0 0
        %1056 = vmatprep.subr.bf16.mxu0 0
        %1057 = vmatpush1.bf16.msra.mxu0 0
        %1058 = vmatprep.subr.bf16.mxu0 0
        %1059 = vmatpush1.bf16.msra.mxu0 0
        %1060 = vmatprep.subr.bf16.mxu0 0
        %1061 = vmatpush1.bf16.msra.mxu0 0
        %1062 = vmatprep.subr.bf16.mxu0 0
        %1063 = vmatpush1.bf16.msra.mxu0 0
        %1064 = vmatprep.subr.bf16.mxu0 0
        %1065 = vmatpush1.bf16.msra.mxu0 0
        %1066 = vmatprep.subr.bf16.mxu0 0
        %1067 = vmatpush1.bf16.msra.mxu0 0
        %1068 = vmatprep.subr.bf16.mxu0 0
        %1069 = vmatpush1.bf16.msra.mxu0 0
        %1070 = vmatprep.mubr.bf16.mxu0 0
        %1071 = vmatmul.mubr.bf16.gmra.mrb[0].mxu0 0
        %v1072 = vpop.f32.mrb[0].mxu0
        %v1073 = vadd.f32 0.0, %v1072
        %v1074 = vpop.f32.mrb[0].mxu0
        %v1075 = vadd.f32 0.0, %v1074
        %v1076 = vpop.f32.mrb[0].mxu0
        %v1077 = vadd.f32 0.0, %v1076
        %v1078 = vpop.f32.mrb[0].mxu0
        %v1079 = vadd.f32 0.0, %v1078
        %1080 = vdwg.mxu0
        %1081 = vmatprep.subr.bf16.mxu0 %v977
        %1082 = vmatpush1.bf16.msra.mxu0 %v976
        %1083 = vmatprep.subr.bf16.mxu0 %v981
        %1084 = vmatpush1.bf16.msra.mxu0 %v980
        %1085 = vmatprep.subr.bf16.mxu0 %v985
        %1086 = vmatpush1.bf16.msra.mxu0 %v984
        %1087 = vmatprep.subr.bf16.mxu0 %v989
        %1088 = vmatpush1.bf16.msra.mxu0 %v988
        %1089 = vmatprep.subr.bf16.mxu0 %v993
        %1090 = vmatpush1.bf16.msra.mxu0 %v992
        %1091 = vmatprep.subr.bf16.mxu0 %v997
        %1092 = vmatpush1.bf16.msra.mxu0 %v996
        %1093 = vmatprep.subr.bf16.mxu0 %v1001
        %1094 = vmatpush1.bf16.msra.mxu0 %v1000
        %1095 = vmatprep.subr.bf16.mxu0 %v1005
        %1096 = vmatpush1.bf16.msra.mxu0 %v1004
        %1097 = vmatprep.subr.bf16.mxu0 0
        %1098 = vmatpush1.bf16.msra.mxu0 0
        %1099 = vmatprep.subr.bf16.mxu0 0
        %1100 = vmatpush1.bf16.msra.mxu0 0
        %1101 = vmatprep.subr.bf16.mxu0 0
        %1102 = vmatpush1.bf16.msra.mxu0 0
        %1103 = vmatprep.subr.bf16.mxu0 0
        %1104 = vmatpush1.bf16.msra.mxu0 0
        %1105 = vmatprep.subr.bf16.mxu0 0
        %1106 = vmatpush1.bf16.msra.mxu0 0
        %1107 = vmatprep.subr.bf16.mxu0 0
        %1108 = vmatpush1.bf16.msra.mxu0 0
        %1109 = vmatprep.subr.bf16.mxu0 0
        %1110 = vmatpush1.bf16.msra.mxu0 0
        %1111 = vmatprep.subr.bf16.mxu0 0
        %1112 = vmatpush1.bf16.msra.mxu0 0
        %1113 = vmatprep.mubr.bf16.mxu0 0
        %1114 = vmatmul.mubr.bf16.gmra.mrb[0].mxu0 0
        %v1115 = vpop.f32.mrb[0].mxu0
        %v1116 = vadd.f32 0.0, %v1115
        %v1117 = vpop.f32.mrb[0].mxu0
        %v1118 = vadd.f32 0.0, %v1117
        %v1119 = vpop.f32.mrb[0].mxu0
        %v1120 = vadd.f32 0.0, %v1119
        %v1121 = vpop.f32.mrb[0].mxu0
        %v1122 = vadd.f32 0.0, %v1121
        %1123 = vdwg.mxu0
        %v1124 = vadd.f32 %v870, %v1073
        %v1125 = vadd.f32 %v871, %v1075
        %v1126 = vadd.f32 %v872, %v1116
        %v1127 = vadd.f32 %v873, %v1118
        %v1128 = vadd.f32 %v874, %v1077
        %v1129 = vadd.f32 %v875, %v1079
        %v1130 = vadd.f32 %v876, %v1120
        %v1131 = vadd.f32 %v877, %v1122
        %v1132 = vxor.u32 %v1124, 2147483648
        %v1133 = vxor.u32 %v1125, 2147483648
        %v1134 = vxor.u32 %v1126, 2147483648
        %v1135 = vxor.u32 %v1128, 2147483648
        %v1136 = vxor.u32 %v1129, 2147483648
        %v1137 = vxor.u32 %v1130, 2147483648
        %v1138 = vmul.f32 %v1132, 1.442695
        %v1139 = vpow.pop %v1138
        %v1140 = vmul.f32 %v1133, 1.442695
        %v1141 = vpow.pop %v1140
        %v1142 = vmul.f32 %v1134, 1.442695
        %v1143 = vpow.pop %v1142
        %v1144 = vmul.f32 %v1135, 1.442695
        %v1145 = vpow.pop %v1144
        %v1146 = vmul.f32 %v1136, 1.442695
        %v1147 = vpow.pop %v1146
        %v1148 = vmul.f32 %v1137, 1.442695
        %v1149 = vpow.pop %v1148
        %v1150 = vadd.f32 %v1139, 1.0
        %v1151 = vadd.f32 %v1141, 1.0
        %v1152 = vadd.f32 %v1143, 1.0
        %v1153 = vadd.f32 %v1145, 1.0
        %v1154 = vadd.f32 %v1147, 1.0
        %v1155 = vadd.f32 %v1149, 1.0
        %v1156 = vrcp.pop %v1150
        %v1157 = vmul.f32 1.0, %v1156
        %v1158 = vrcp.pop %v1151
        %v1159 = vmul.f32 1.0, %v1158
        %v1160 = vrcp.pop %v1152
        %v1161 = vmul.f32 1.0, %v1160
        %v1162 = vrcp.pop %v1153
        %v1163 = vmul.f32 1.0, %v1162
        %v1164 = vrcp.pop %v1154
        %v1165 = vmul.f32 1.0, %v1164
        %v1166 = vrcp.pop %v1155
        %v1167 = vmul.f32 1.0, %v1166
        %v1168 = vtanh.pop %v1127
        %v1169 = vtanh.pop %v1131
        %v1170 = vmul.f32 %v1159, 0.0
        %v1171 = vmul.f32 %v1165, 0.0
        %v1172 = vmul.f32 %v1157, %v1168
        %v1173 = vmul.f32 %v1163, %v1169
        %v1174 = vadd.f32 %v1170, %v1172
        %v1175 = vadd.f32 %v1171, %v1173
        %v1176 = vtanh.pop %v1174
        %v1177 = vtanh.pop %v1175
        %v1178 = vmul.f32 %v1161, %v1176
        %v1179 = vmul.f32 %v1167, %v1177
        %v1180 = vpack.c.bf16 %v1179, %v1178
        %1181 = vst [vmem:[#allocation2] sm:$0xff] %v1180
        %s1182 = smul.u32 2, 4
        %s1183 = smul.addr %s1182, 8
        %s1184 = scalar_lea.vmem [#allocation3], %s1183
        %v1185 = vld [vmem:[%s1184] sm:$0xff]
        %v1186 = vld [vmem:[%s1184 + $0x8] sm:$0xff]
        %v1187 = vld [vmem:[%s1184 + $0x10] sm:$0xff]
        %v1188 = vld [vmem:[%s1184 + $0x18] sm:$0xff]
        %v1189 = vld [vmem:[%s1184 + $0x20] sm:$0xff]
        %v1190 = vld [vmem:[%s1184 + $0x28] sm:$0xff]
        %v1191 = vld [vmem:[%s1184 + $0x30] sm:$0xff]
        %v1192 = vld [vmem:[%s1184 + $0x38] sm:$0xff]
        %1193 = vmatprep.subr.bf16.mxu0 %v975
        %1194 = vmatpush1.bf16.msra.mxu0 %v974
        %1195 = vmatprep.subr.bf16.mxu0 %v979
        %1196 = vmatpush1.bf16.msra.mxu0 %v978
        %1197 = vmatprep.subr.bf16.mxu0 %v983
        %1198 = vmatpush1.bf16.msra.mxu0 %v982
        %1199 = vmatprep.subr.bf16.mxu0 %v987
        %1200 = vmatpush1.bf16.msra.mxu0 %v986
        %1201 = vmatprep.subr.bf16.mxu0 %v991
        %1202 = vmatpush1.bf16.msra.mxu0 %v990
        %1203 = vmatprep.subr.bf16.mxu0 %v995
        %1204 = vmatpush1.bf16.msra.mxu0 %v994
        %1205 = vmatprep.subr.bf16.mxu0 %v999
        %1206 = vmatpush1.bf16.msra.mxu0 %v998
        %1207 = vmatprep.subr.bf16.mxu0 %v1003
        %1208 = vmatpush1.bf16.msra.mxu0 %v1002
        %1209 = vmatprep.subr.bf16.mxu0 0
        %1210 = vmatpush1.bf16.msra.mxu0 0
        %1211 = vmatprep.subr.bf16.mxu0 0
        %1212 = vmatpush1.bf16.msra.mxu0 0
        %1213 = vmatprep.subr.bf16.mxu0 0
        %1214 = vmatpush1.bf16.msra.mxu0 0
        %1215 = vmatprep.subr.bf16.mxu0 0
        %1216 = vmatpush1.bf16.msra.mxu0 0
        %1217 = vmatprep.subr.bf16.mxu0 0
        %1218 = vmatpush1.bf16.msra.mxu0 0
        %1219 = vmatprep.subr.bf16.mxu0 0
        %1220 = vmatpush1.bf16.msra.mxu0 0
        %1221 = vmatprep.subr.bf16.mxu0 0
        %1222 = vmatpush1.bf16.msra.mxu0 0
        %1223 = vmatprep.subr.bf16.mxu0 0
        %1224 = vmatpush1.bf16.msra.mxu0 0
        %1225 = vmatprep.mubr.bf16.mxu0 0
        %1226 = vmatmul.mubr.bf16.gmra.mrb[0].mxu0 %v1180
        %v1227 = vpop.f32.mrb[0].mxu0
        %v1228 = vadd.f32 0.0, %v1227
        %v1229 = vpop.f32.mrb[0].mxu0
        %v1230 = vadd.f32 0.0, %v1229
        %v1231 = vpop.f32.mrb[0].mxu0
        %v1232 = vadd.f32 0.0, %v1231
        %v1233 = vpop.f32.mrb[0].mxu0
        %v1234 = vadd.f32 0.0, %v1233
        %1235 = vdwg.mxu0
        %1236 = vmatprep.subr.bf16.mxu0 %v977
        %1237 = vmatpush1.bf16.msra.mxu0 %v976
        %1238 = vmatprep.subr.bf16.mxu0 %v981
        %1239 = vmatpush1.bf16.msra.mxu0 %v980
        %1240 = vmatprep.subr.bf16.mxu0 %v985
        %1241 = vmatpush1.bf16.msra.mxu0 %v984
        %1242 = vmatprep.subr.bf16.mxu0 %v989
        %1243 = vmatpush1.bf16.msra.mxu0 %v988
        %1244 = vmatprep.subr.bf16.mxu0 %v993
        %1245 = vmatpush1.bf16.msra.mxu0 %v992
        %1246 = vmatprep.subr.bf16.mxu0 %v997
        %1247 = vmatpush1.bf16.msra.mxu0 %v996
        %1248 = vmatprep.subr.bf16.mxu0 %v1001
        %1249 = vmatpush1.bf16.msra.mxu0 %v1000
        %1250 = vmatprep.subr.bf16.mxu0 %v1005
        %1251 = vmatpush1.bf16.msra.mxu0 %v1004
        %1252 = vmatprep.subr.bf16.mxu0 0
        %1253 = vmatpush1.bf16.msra.mxu0 0
        %1254 = vmatprep.subr.bf16.mxu0 0
        %1255 = vmatpush1.bf16.msra.mxu0 0
        %1256 = vmatprep.subr.bf16.mxu0 0
        %1257 = vmatpush1.bf16.msra.mxu0 0
        %1258 = vmatprep.subr.bf16.mxu0 0
        %1259 = vmatpush1.bf16.msra.mxu0 0
        %1260 = vmatprep.subr.bf16.mxu0 0
        %1261 = vmatpush1.bf16.msra.mxu0 0
        %1262 = vmatprep.subr.bf16.mxu0 0
        %1263 = vmatpush1.bf16.msra.mxu0 0
        %1264 = vmatprep.subr.bf16.mxu0 0
        %1265 = vmatpush1.bf16.msra.mxu0 0
        %1266 = vmatprep.subr.bf16.mxu0 0
        %1267 = vmatpush1.bf16.msra.mxu0 0
        %1268 = vmatprep.mubr.bf16.mxu0 0
        %1269 = vmatmul.mubr.bf16.gmra.mrb[0].mxu0 %v1180
        %v1270 = vpop.f32.mrb[0].mxu0
        %v1271 = vadd.f32 0.0, %v1270
        %v1272 = vpop.f32.mrb[0].mxu0
        %v1273 = vadd.f32 0.0, %v1272
        %v1274 = vpop.f32.mrb[0].mxu0
        %v1275 = vadd.f32 0.0, %v1274
        %v1276 = vpop.f32.mrb[0].mxu0
        %v1277 = vadd.f32 0.0, %v1276
        %1278 = vdwg.mxu0
        %v1279 = vadd.f32 %v1185, %v1228
        %v1280 = vadd.f32 %v1186, %v1230
        %v1281 = vadd.f32 %v1187, %v1271
        %v1282 = vadd.f32 %v1188, %v1273
        %v1283 = vadd.f32 %v1189, %v1232
        %v1284 = vadd.f32 %v1190, %v1234
        %v1285 = vadd.f32 %v1191, %v1275
        %v1286 = vadd.f32 %v1192, %v1277
        %v1287 = vxor.u32 %v1279, 2147483648
        %v1288 = vxor.u32 %v1280, 2147483648
        %v1289 = vxor.u32 %v1281, 2147483648
        %v1290 = vxor.u32 %v1283, 2147483648
        %v1291 = vxor.u32 %v1284, 2147483648
        %v1292 = vxor.u32 %v1285, 2147483648
        %v1293 = vmul.f32 %v1287, 1.442695
        %v1294 = vpow.pop %v1293
        %v1295 = vmul.f32 %v1288, 1.442695
        %v1296 = vpow.pop %v1295
        %v1297 = vmul.f32 %v1289, 1.442695
        %v1298 = vpow.pop %v1297
        %v1299 = vmul.f32 %v1290, 1.442695
        %v1300 = vpow.pop %v1299
        %v1301 = vmul.f32 %v1291, 1.442695
        %v1302 = vpow.pop %v1301
        %v1303 = vmul.f32 %v1292, 1.442695
        %v1304 = vpow.pop %v1303
        %v1305 = vadd.f32 %v1294, 1.0
        %v1306 = vadd.f32 %v1296, 1.0
        %v1307 = vadd.f32 %v1298, 1.0
        %v1308 = vadd.f32 %v1300, 1.0
        %v1309 = vadd.f32 %v1302, 1.0
        %v1310 = vadd.f32 %v1304, 1.0
        %v1311 = vrcp.pop %v1305
        %v1312 = vmul.f32 1.0, %v1311
        %v1313 = vrcp.pop %v1306
        %v1314 = vmul.f32 1.0, %v1313
        %v1315 = vrcp.pop %v1307
        %v1316 = vmul.f32 1.0, %v1315
        %v1317 = vrcp.pop %v1308
        %v1318 = vmul.f32 1.0, %v1317
        %v1319 = vrcp.pop %v1309
        %v1320 = vmul.f32 1.0, %v1319
        %v1321 = vrcp.pop %v1310
        %v1322 = vmul.f32 1.0, %v1321
        %v1323 = vtanh.pop %v1282
        %v1324 = vtanh.pop %v1286
        %v1325 = vmul.f32 %v1314, %v1174
        %v1326 = vmul.f32 %v1320, %v1175
        %v1327 = vmul.f32 %v1312, %v1323
        %v1328 = vmul.f32 %v1318, %v1324
        %v1329 = vadd.f32 %v1325, %v1327
        %v1330 = vadd.f32 %v1326, %v1328
        %v1331 = vtanh.pop %v1329
        %v1332 = vtanh.pop %v1330
        %v1333 = vmul.f32 %v1316, %v1331
        %v1334 = vmul.f32 %v1322, %v1332
        %v1335 = vpack.c.bf16 %v1334, %v1333
        %s1336 = scalar_lea.vmem [#allocation2], 8
        %1337 = vst [vmem:[%s1336] sm:$0xff] %v1335
        %s1338 = smul.u32 4, 4
        %s1339 = smul.addr %s1338, 8
        %s1340 = scalar_lea.vmem [#allocation3], %s1339
        %v1341 = vld [vmem:[%s1340] sm:$0xff]
        %v1342 = vld [vmem:[%s1340 + $0x8] sm:$0xff]
        %v1343 = vld [vmem:[%s1340 + $0x10] sm:$0xff]
        %v1344 = vld [vmem:[%s1340 + $0x18] sm:$0xff]
        %v1345 = vld [vmem:[%s1340 + $0x20] sm:$0xff]
        %v1346 = vld [vmem:[%s1340 + $0x28] sm:$0xff]
        %v1347 = vld [vmem:[%s1340 + $0x30] sm:$0xff]
        %v1348 = vld [vmem:[%s1340 + $0x38] sm:$0xff]
        %1349 = vmatprep.subr.bf16.mxu0 %v975
        %1350 = vmatpush1.bf16.msra.mxu0 %v974
        %1351 = vmatprep.subr.bf16.mxu0 %v979
        %1352 = vmatpush1.bf16.msra.mxu0 %v978
        %1353 = vmatprep.subr.bf16.mxu0 %v983
        %1354 = vmatpush1.bf16.msra.mxu0 %v982
        %1355 = vmatprep.subr.bf16.mxu0 %v987
        %1356 = vmatpush1.bf16.msra.mxu0 %v986
        %1357 = vmatprep.subr.bf16.mxu0 %v991
        %1358 = vmatpush1.bf16.msra.mxu0 %v990
        %1359 = vmatprep.subr.bf16.mxu0 %v995
        %1360 = vmatpush1.bf16.msra.mxu0 %v994
        %1361 = vmatprep.subr.bf16.mxu0 %v999
        %1362 = vmatpush1.bf16.msra.mxu0 %v998
        %1363 = vmatprep.subr.bf16.mxu0 %v1003
        %1364 = vmatpush1.bf16.msra.mxu0 %v1002
        %1365 = vmatprep.subr.bf16.mxu0 0
        %1366 = vmatpush1.bf16.msra.mxu0 0
        %1367 = vmatprep.subr.bf16.mxu0 0
        %1368 = vmatpush1.bf16.msra.mxu0 0
        %1369 = vmatprep.subr.bf16.mxu0 0
        %1370 = vmatpush1.bf16.msra.mxu0 0
        %1371 = vmatprep.subr.bf16.mxu0 0
        %1372 = vmatpush1.bf16.msra.mxu0 0
        %1373 = vmatprep.subr.bf16.mxu0 0
        %1374 = vmatpush1.bf16.msra.mxu0 0
        %1375 = vmatprep.subr.bf16.mxu0 0
        %1376 = vmatpush1.bf16.msra.mxu0 0
        %1377 = vmatprep.subr.bf16.mxu0 0
        %1378 = vmatpush1.bf16.msra.mxu0 0
        %1379 = vmatprep.subr.bf16.mxu0 0
        %1380 = vmatpush1.bf16.msra.mxu0 0
        %1381 = vmatprep.mubr.bf16.mxu0 0
        %1382 = vmatmul.mubr.bf16.gmra.mrb[0].mxu0 %v1335
        %v1383 = vpop.f32.mrb[0].mxu0
        %v1384 = vadd.f32 0.0, %v1383
        %v1385 = vpop.f32.mrb[0].mxu0
        %v1386 = vadd.f32 0.0, %v1385
        %v1387 = vpop.f32.mrb[0].mxu0
        %v1388 = vadd.f32 0.0, %v1387
        %v1389 = vpop.f32.mrb[0].mxu0
        %v1390 = vadd.f32 0.0, %v1389
        %1391 = vdwg.mxu0
        %1392 = vmatprep.subr.bf16.mxu0 %v977
        %1393 = vmatpush1.bf16.msra.mxu0 %v976
        %1394 = vmatprep.subr.bf16.mxu0 %v981
        %1395 = vmatpush1.bf16.msra.mxu0 %v980
        %1396 = vmatprep.subr.bf16.mxu0 %v985
        %1397 = vmatpush1.bf16.msra.mxu0 %v984
        %1398 = vmatprep.subr.bf16.mxu0 %v989
        %1399 = vmatpush1.bf16.msra.mxu0 %v988
        %1400 = vmatprep.subr.bf16.mxu0 %v993
        %1401 = vmatpush1.bf16.msra.mxu0 %v992
        %1402 = vmatprep.subr.bf16.mxu0 %v997
        %1403 = vmatpush1.bf16.msra.mxu0 %v996
        %1404 = vmatprep.subr.bf16.mxu0 %v1001
        %1405 = vmatpush1.bf16.msra.mxu0 %v1000
        %1406 = vmatprep.subr.bf16.mxu0 %v1005
        %1407 = vmatpush1.bf16.msra.mxu0 %v1004
        %1408 = vmatprep.subr.bf16.mxu0 0
        %1409 = vmatpush1.bf16.msra.mxu0 0
        %1410 = vmatprep.subr.bf16.mxu0 0
        %1411 = vmatpush1.bf16.msra.mxu0 0
        %1412 = vmatprep.subr.bf16.mxu0 0
        %1413 = vmatpush1.bf16.msra.mxu0 0
        %1414 = vmatprep.subr.bf16.mxu0 0
        %1415 = vmatpush1.bf16.msra.mxu0 0
        %1416 = vmatprep.subr.bf16.mxu0 0
        %1417 = vmatpush1.bf16.msra.mxu0 0
        %1418 = vmatprep.subr.bf16.mxu0 0
        %1419 = vmatpush1.bf16.msra.mxu0 0
        %1420 = vmatprep.subr.bf16.mxu0 0
        %1421 = vmatpush1.bf16.msra.mxu0 0
        %1422 = vmatprep.subr.bf16.mxu0 0
        %1423 = vmatpush1.bf16.msra.mxu0 0
        %1424 = vmatprep.mubr.bf16.mxu0 0
        %1425 = vmatmul.mubr.bf16.gmra.mrb[0].mxu0 %v1335
        %v1426 = vpop.f32.mrb[0].mxu0
        %v1427 = vadd.f32 0.0, %v1426
        %v1428 = vpop.f32.mrb[0].mxu0
        %v1429 = vadd.f32 0.0, %v1428
        %v1430 = vpop.f32.mrb[0].mxu0
        %v1431 = vadd.f32 0.0, %v1430
        %v1432 = vpop.f32.mrb[0].mxu0
        %v1433 = vadd.f32 0.0, %v1432
        %1434 = vdwg.mxu0
        %v1435 = vadd.f32 %v1341, %v1384
        %v1436 = vadd.f32 %v1342, %v1386
        %v1437 = vadd.f32 %v1343, %v1427
        %v1438 = vadd.f32 %v1344, %v1429
        %v1439 = vadd.f32 %v1345, %v1388
        %v1440 = vadd.f32 %v1346, %v1390
        %v1441 = vadd.f32 %v1347, %v1431
        %v1442 = vadd.f32 %v1348, %v1433
        %v1443 = vxor.u32 %v1435, 2147483648
        %v1444 = vxor.u32 %v1436, 2147483648
        %v1445 = vxor.u32 %v1437, 2147483648
        %v1446 = vxor.u32 %v1439, 2147483648
        %v1447 = vxor.u32 %v1440, 2147483648
        %v1448 = vxor.u32 %v1441, 2147483648
        %v1449 = vmul.f32 %v1443, 1.442695
        %v1450 = vpow.pop %v1449
        %v1451 = vmul.f32 %v1444, 1.442695
        %v1452 = vpow.pop %v1451
        %v1453 = vmul.f32 %v1445, 1.442695
        %v1454 = vpow.pop %v1453
        %v1455 = vmul.f32 %v1446, 1.442695
        %v1456 = vpow.pop %v1455
        %v1457 = vmul.f32 %v1447, 1.442695
        %v1458 = vpow.pop %v1457
        %v1459 = vmul.f32 %v1448, 1.442695
        %v1460 = vpow.pop %v1459
        %v1461 = vadd.f32 %v1450, 1.0
        %v1462 = vadd.f32 %v1452, 1.0
        %v1463 = vadd.f32 %v1454, 1.0
        %v1464 = vadd.f32 %v1456, 1.0
        %v1465 = vadd.f32 %v1458, 1.0
        %v1466 = vadd.f32 %v1460, 1.0
        %v1467 = vrcp.pop %v1461
        %v1468 = vmul.f32 1.0, %v1467
        %v1469 = vrcp.pop %v1462
        %v1470 = vmul.f32 1.0, %v1469
        %v1471 = vrcp.pop %v1463
        %v1472 = vmul.f32 1.0, %v1471
        %v1473 = vrcp.pop %v1464
        %v1474 = vmul.f32 1.0, %v1473
        %v1475 = vrcp.pop %v1465
        %v1476 = vmul.f32 1.0, %v1475
        %v1477 = vrcp.pop %v1466
        %v1478 = vmul.f32 1.0, %v1477
        %v1479 = vtanh.pop %v1438
        %v1480 = vtanh.pop %v1442
        %v1481 = vmul.f32 %v1470, %v1329
        %v1482 = vmul.f32 %v1476, %v1330
        %v1483 = vmul.f32 %v1468, %v1479
        %v1484 = vmul.f32 %v1474, %v1480
        %v1485 = vadd.f32 %v1481, %v1483
        %v1486 = vadd.f32 %v1482, %v1484
        %v1487 = vtanh.pop %v1485
        %v1488 = vtanh.pop %v1486
        %v1489 = vmul.f32 %v1472, %v1487
        %v1490 = vmul.f32 %v1478, %v1488
        %v1491 = vpack.c.bf16 %v1490, %v1489
        %s1492 = scalar_lea.vmem [#allocation2], 16
        %1493 = vst [vmem:[%s1492] sm:$0xff] %v1491
        %s1494 = smul.u32 6, 4
        %s1495 = smul.addr %s1494, 8
        %s1496 = scalar_lea.vmem [#allocation3], %s1495
        %v1497 = vld [vmem:[%s1496] sm:$0xff]
        %v1498 = vld [vmem:[%s1496 + $0x8] sm:$0xff]
        %v1499 = vld [vmem:[%s1496 + $0x10] sm:$0xff]
        %v1500 = vld [vmem:[%s1496 + $0x18] sm:$0xff]
        %v1501 = vld [vmem:[%s1496 + $0x20] sm:$0xff]
        %v1502 = vld [vmem:[%s1496 + $0x28] sm:$0xff]
        %v1503 = vld [vmem:[%s1496 + $0x30] sm:$0xff]
        %v1504 = vld [vmem:[%s1496 + $0x38] sm:$0xff]
        %1505 = vmatprep.subr.bf16.mxu0 %v975
        %1506 = vmatpush1.bf16.msra.mxu0 %v974
        %1507 = vmatprep.subr.bf16.mxu0 %v979
        %1508 = vmatpush1.bf16.msra.mxu0 %v978
        %1509 = vmatprep.subr.bf16.mxu0 %v983
        %1510 = vmatpush1.bf16.msra.mxu0 %v982
        %1511 = vmatprep.subr.bf16.mxu0 %v987
        %1512 = vmatpush1.bf16.msra.mxu0 %v986
        %1513 = vmatprep.subr.bf16.mxu0 %v991
        %1514 = vmatpush1.bf16.msra.mxu0 %v990
        %1515 = vmatprep.subr.bf16.mxu0 %v995
        %1516 = vmatpush1.bf16.msra.mxu0 %v994
        %1517 = vmatprep.subr.bf16.mxu0 %v999
        %1518 = vmatpush1.bf16.msra.mxu0 %v998
        %1519 = vmatprep.subr.bf16.mxu0 %v1003
        %1520 = vmatpush1.bf16.msra.mxu0 %v1002
        %1521 = vmatprep.subr.bf16.mxu0 0
        %1522 = vmatpush1.bf16.msra.mxu0 0
        %1523 = vmatprep.subr.bf16.mxu0 0
        %1524 = vmatpush1.bf16.msra.mxu0 0
        %1525 = vmatprep.subr.bf16.mxu0 0
        %1526 = vmatpush1.bf16.msra.mxu0 0
        %1527 = vmatprep.subr.bf16.mxu0 0
        %1528 = vmatpush1.bf16.msra.mxu0 0
        %1529 = vmatprep.subr.bf16.mxu0 0
        %1530 = vmatpush1.bf16.msra.mxu0 0
        %1531 = vmatprep.subr.bf16.mxu0 0
        %1532 = vmatpush1.bf16.msra.mxu0 0
        %1533 = vmatprep.subr.bf16.mxu0 0
        %1534 = vmatpush1.bf16.msra.mxu0 0
        %1535 = vmatprep.subr.bf16.mxu0 0
        %1536 = vmatpush1.bf16.msra.mxu0 0
        %1537 = vmatprep.mubr.bf16.mxu0 0
        %1538 = vmatmul.mubr.bf16.gmra.mrb[0].mxu0 %v1491
        %v1539 = vpop.f32.mrb[0].mxu0
        %v1540 = vadd.f32 0.0, %v1539
        %v1541 = vpop.f32.mrb[0].mxu0
        %v1542 = vadd.f32 0.0, %v1541
        %v1543 = vpop.f32.mrb[0].mxu0
        %v1544 = vadd.f32 0.0, %v1543
        %v1545 = vpop.f32.mrb[0].mxu0
        %v1546 = vadd.f32 0.0, %v1545
        %1547 = vdwg.mxu0
        %1548 = vmatprep.subr.bf16.mxu0 %v977
        %1549 = vmatpush1.bf16.msra.mxu0 %v976
        %1550 = vmatprep.subr.bf16.mxu0 %v981
        %1551 = vmatpush1.bf16.msra.mxu0 %v980
        %1552 = vmatprep.subr.bf16.mxu0 %v985
        %1553 = vmatpush1.bf16.msra.mxu0 %v984
        %1554 = vmatprep.subr.bf16.mxu0 %v989
        %1555 = vmatpush1.bf16.msra.mxu0 %v988
        %1556 = vmatprep.subr.bf16.mxu0 %v993
        %1557 = vmatpush1.bf16.msra.mxu0 %v992
        %1558 = vmatprep.subr.bf16.mxu0 %v997
        %1559 = vmatpush1.bf16.msra.mxu0 %v996
        %1560 = vmatprep.subr.bf16.mxu0 %v1001
        %1561 = vmatpush1.bf16.msra.mxu0 %v1000
        %1562 = vmatprep.subr.bf16.mxu0 %v1005
        %1563 = vmatpush1.bf16.msra.mxu0 %v1004
        %1564 = vmatprep.subr.bf16.mxu0 0
        %1565 = vmatpush1.bf16.msra.mxu0 0
        %1566 = vmatprep.subr.bf16.mxu0 0
        %1567 = vmatpush1.bf16.msra.mxu0 0
        %1568 = vmatprep.subr.bf16.mxu0 0
        %1569 = vmatpush1.bf16.msra.mxu0 0
        %1570 = vmatprep.subr.bf16.mxu0 0
        %1571 = vmatpush1.bf16.msra.mxu0 0
        %1572 = vmatprep.subr.bf16.mxu0 0
        %1573 = vmatpush1.bf16.msra.mxu0 0
        %1574 = vmatprep.subr.bf16.mxu0 0
        %1575 = vmatpush1.bf16.msra.mxu0 0
        %1576 = vmatprep.subr.bf16.mxu0 0
        %1577 = vmatpush1.bf16.msra.mxu0 0
        %1578 = vmatprep.subr.bf16.mxu0 0
        %1579 = vmatpush1.bf16.msra.mxu0 0
        %1580 = vmatprep.mubr.bf16.mxu0 0
        %1581 = vmatmul.mubr.bf16.gmra.mrb[0].mxu0 %v1491
        %v1582 = vpop.f32.mrb[0].mxu0
        %v1583 = vadd.f32 0.0, %v1582
        %v1584 = vpop.f32.mrb[0].mxu0
        %v1585 = vadd.f32 0.0, %v1584
        %v1586 = vpop.f32.mrb[0].mxu0
        %v1587 = vadd.f32 0.0, %v1586
        %v1588 = vpop.f32.mrb[0].mxu0
        %v1589 = vadd.f32 0.0, %v1588
        %1590 = vdwg.mxu0
        %v1591 = vadd.f32 %v1497, %v1540
        %v1592 = vadd.f32 %v1498, %v1542
        %v1593 = vadd.f32 %v1499, %v1583
        %v1594 = vadd.f32 %v1500, %v1585
        %v1595 = vadd.f32 %v1501, %v1544
        %v1596 = vadd.f32 %v1502, %v1546
        %v1597 = vadd.f32 %v1503, %v1587
        %v1598 = vadd.f32 %v1504, %v1589
        %v1599 = vxor.u32 %v1591, 2147483648
        %v1600 = vxor.u32 %v1592, 2147483648
        %v1601 = vxor.u32 %v1593, 2147483648
        %v1602 = vxor.u32 %v1595, 2147483648
        %v1603 = vxor.u32 %v1596, 2147483648
        %v1604 = vxor.u32 %v1597, 2147483648
        %v1605 = vmul.f32 %v1599, 1.442695
        %v1606 = vpow.pop %v1605
        %v1607 = vmul.f32 %v1600, 1.442695
        %v1608 = vpow.pop %v1607
        %v1609 = vmul.f32 %v1601, 1.442695
        %v1610 = vpow.pop %v1609
        %v1611 = vmul.f32 %v1602, 1.442695
        %v1612 = vpow.pop %v1611
        %v1613 = vmul.f32 %v1603, 1.442695
        %v1614 = vpow.pop %v1613
        %v1615 = vmul.f32 %v1604, 1.442695
        %v1616 = vpow.pop %v1615
        %v1617 = vadd.f32 %v1606, 1.0
        %v1618 = vadd.f32 %v1608, 1.0
        %v1619 = vadd.f32 %v1610, 1.0
        %v1620 = vadd.f32 %v1612, 1.0
        %v1621 = vadd.f32 %v1614, 1.0
        %v1622 = vadd.f32 %v1616, 1.0
        %v1623 = vrcp.pop %v1617
        %v1624 = vmul.f32 1.0, %v1623
        %v1625 = vrcp.pop %v1618
        %v1626 = vmul.f32 1.0, %v1625
        %v1627 = vrcp.pop %v1619
        %v1628 = vmul.f32 1.0, %v1627
        %v1629 = vrcp.pop %v1620
        %v1630 = vmul.f32 1.0, %v1629
        %v1631 = vrcp.pop %v1621
        %v1632 = vmul.f32 1.0, %v1631
        %v1633 = vrcp.pop %v1622
        %v1634 = vmul.f32 1.0, %v1633
        %v1635 = vtanh.pop %v1594
        %v1636 = vtanh.pop %v1598
        %v1637 = vmul.f32 %v1626, %v1485
        %v1638 = vmul.f32 %v1632, %v1486
        %v1639 = vmul.f32 %v1624, %v1635
        %v1640 = vmul.f32 %v1630, %v1636
        %v1641 = vadd.f32 %v1637, %v1639
        %v1642 = vadd.f32 %v1638, %v1640
        %v1643 = vtanh.pop %v1641
        %v1644 = vtanh.pop %v1642
        %v1645 = vmul.f32 %v1628, %v1643
        %v1646 = vmul.f32 %v1634, %v1644
        %v1647 = vpack.c.bf16 %v1646, %v1645
        %s1648 = scalar_lea.vmem [#allocation2], 24
        %1649 = vst [vmem:[%s1648] sm:$0xff] %v1647
        %s1650 = smul.u32 8, 4
        %s1651 = smul.addr %s1650, 8
        %s1652 = scalar_lea.vmem [#allocation3], %s1651
        %v1653 = vld [vmem:[%s1652] sm:$0xff]
        %v1654 = vld [vmem:[%s1652 + $0x8] sm:$0xff]
        %v1655 = vld [vmem:[%s1652 + $0x10] sm:$0xff]
        %v1656 = vld [vmem:[%s1652 + $0x18] sm:$0xff]
        %v1657 = vld [vmem:[%s1652 + $0x20] sm:$0xff]
        %v1658 = vld [vmem:[%s1652 + $0x28] sm:$0xff]
        %v1659 = vld [vmem:[%s1652 + $0x30] sm:$0xff]
        %v1660 = vld [vmem:[%s1652 + $0x38] sm:$0xff]
        %1661 = vmatprep.subr.bf16.mxu0 %v975
        %1662 = vmatpush1.bf16.msra.mxu0 %v974
        %1663 = vmatprep.subr.bf16.mxu0 %v979
        %1664 = vmatpush1.bf16.msra.mxu0 %v978
        %1665 = vmatprep.subr.bf16.mxu0 %v983
        %1666 = vmatpush1.bf16.msra.mxu0 %v982
        %1667 = vmatprep.subr.bf16.mxu0 %v987
        %1668 = vmatpush1.bf16.msra.mxu0 %v986
        %1669 = vmatprep.subr.bf16.mxu0 %v991
        %1670 = vmatpush1.bf16.msra.mxu0 %v990
        %1671 = vmatprep.subr.bf16.mxu0 %v995
        %1672 = vmatpush1.bf16.msra.mxu0 %v994
        %1673 = vmatprep.subr.bf16.mxu0 %v999
        %1674 = vmatpush1.bf16.msra.mxu0 %v998
        %1675 = vmatprep.subr.bf16.mxu0 %v1003
        %1676 = vmatpush1.bf16.msra.mxu0 %v1002
        %1677 = vmatprep.subr.bf16.mxu0 0
        %1678 = vmatpush1.bf16.msra.mxu0 0
        %1679 = vmatprep.subr.bf16.mxu0 0
        %1680 = vmatpush1.bf16.msra.mxu0 0
        %1681 = vmatprep.subr.bf16.mxu0 0
        %1682 = vmatpush1.bf16.msra.mxu0 0
        %1683 = vmatprep.subr.bf16.mxu0 0
        %1684 = vmatpush1.bf16.msra.mxu0 0
        %1685 = vmatprep.subr.bf16.mxu0 0
        %1686 = vmatpush1.bf16.msra.mxu0 0
        %1687 = vmatprep.subr.bf16.mxu0 0
        %1688 = vmatpush1.bf16.msra.mxu0 0
        %1689 = vmatprep.subr.bf16.mxu0 0
        %1690 = vmatpush1.bf16.msra.mxu0 0
        %1691 = vmatprep.subr.bf16.mxu0 0
        %1692 = vmatpush1.bf16.msra.mxu0 0
        %1693 = vmatprep.mubr.bf16.mxu0 0
        %1694 = vmatmul.mubr.bf16.gmra.mrb[0].mxu0 %v1647
        %v1695 = vpop.f32.mrb[0].mxu0
        %v1696 = vadd.f32 0.0, %v1695
        %v1697 = vpop.f32.mrb[0].mxu0
        %v1698 = vadd.f32 0.0, %v1697
        %v1699 = vpop.f32.mrb[0].mxu0
        %v1700 = vadd.f32 0.0, %v1699
        %v1701 = vpop.f32.mrb[0].mxu0
        %v1702 = vadd.f32 0.0, %v1701
        %1703 = vdwg.mxu0
        %1704 = vmatprep.subr.bf16.mxu0 %v977
        %1705 = vmatpush1.bf16.msra.mxu0 %v976
        %1706 = vmatprep.subr.bf16.mxu0 %v981
        %1707 = vmatpush1.bf16.msra.mxu0 %v980
        %1708 = vmatprep.subr.bf16.mxu0 %v985
        %1709 = vmatpush1.bf16.msra.mxu0 %v984
        %1710 = vmatprep.subr.bf16.mxu0 %v989
        %1711 = vmatpush1.bf16.msra.mxu0 %v988
        %1712 = vmatprep.subr.bf16.mxu0 %v993
        %1713 = vmatpush1.bf16.msra.mxu0 %v992
        %1714 = vmatprep.subr.bf16.mxu0 %v997
        %1715 = vmatpush1.bf16.msra.mxu0 %v996
        %1716 = vmatprep.subr.bf16.mxu0 %v1001
        %1717 = vmatpush1.bf16.msra.mxu0 %v1000
        %1718 = vmatprep.subr.bf16.mxu0 %v1005
        %1719 = vmatpush1.bf16.msra.mxu0 %v1004
        %1720 = vmatprep.subr.bf16.mxu0 0
        %1721 = vmatpush1.bf16.msra.mxu0 0
        %1722 = vmatprep.subr.bf16.mxu0 0
        %1723 = vmatpush1.bf16.msra.mxu0 0
        %1724 = vmatprep.subr.bf16.mxu0 0
        %1725 = vmatpush1.bf16.msra.mxu0 0
        %1726 = vmatprep.subr.bf16.mxu0 0
        %1727 = vmatpush1.bf16.msra.mxu0 0
        %1728 = vmatprep.subr.bf16.mxu0 0
        %1729 = vmatpush1.bf16.msra.mxu0 0
        %1730 = vmatprep.subr.bf16.mxu0 0
        %1731 = vmatpush1.bf16.msra.mxu0 0
        %1732 = vmatprep.subr.bf16.mxu0 0
        %1733 = vmatpush1.bf16.msra.mxu0 0
        %1734 = vmatprep.subr.bf16.mxu0 0
        %1735 = vmatpush1.bf16.msra.mxu0 0
        %1736 = vmatprep.mubr.bf16.mxu0 0
        %1737 = vmatmul.mubr.bf16.gmra.mrb[0].mxu0 %v1647
        %v1738 = vpop.f32.mrb[0].mxu0
        %v1739 = vadd.f32 0.0, %v1738
        %v1740 = vpop.f32.mrb[0].mxu0
        %v1741 = vadd.f32 0.0, %v1740
        %v1742 = vpop.f32.mrb[0].mxu0
        %v1743 = vadd.f32 0.0, %v1742
        %v1744 = vpop.f32.mrb[0].mxu0
        %v1745 = vadd.f32 0.0, %v1744
        %1746 = vdwg.mxu0
        %v1747 = vadd.f32 %v1653, %v1696
        %v1748 = vadd.f32 %v1654, %v1698
        %v1749 = vadd.f32 %v1655, %v1739
        %v1750 = vadd.f32 %v1656, %v1741
        %v1751 = vadd.f32 %v1657, %v1700
        %v1752 = vadd.f32 %v1658, %v1702
        %v1753 = vadd.f32 %v1659, %v1743
        %v1754 = vadd.f32 %v1660, %v1745
        %v1755 = vxor.u32 %v1747, 2147483648
        %v1756 = vxor.u32 %v1748, 2147483648
        %v1757 = vxor.u32 %v1749, 2147483648
        %v1758 = vxor.u32 %v1751, 2147483648
        %v1759 = vxor.u32 %v1752, 2147483648
        %v1760 = vxor.u32 %v1753, 2147483648
        %v1761 = vmul.f32 %v1755, 1.442695
        %v1762 = vpow.pop %v1761
        %v1763 = vmul.f32 %v1756, 1.442695
        %v1764 = vpow.pop %v1763
        %v1765 = vmul.f32 %v1757, 1.442695
        %v1766 = vpow.pop %v1765
        %v1767 = vmul.f32 %v1758, 1.442695
        %v1768 = vpow.pop %v1767
        %v1769 = vmul.f32 %v1759, 1.442695
        %v1770 = vpow.pop %v1769
        %v1771 = vmul.f32 %v1760, 1.442695
        %v1772 = vpow.pop %v1771
        %v1773 = vadd.f32 %v1762, 1.0
        %v1774 = vadd.f32 %v1764, 1.0
        %v1775 = vadd.f32 %v1766, 1.0
        %v1776 = vadd.f32 %v1768, 1.0
        %v1777 = vadd.f32 %v1770, 1.0
        %v1778 = vadd.f32 %v1772, 1.0
        %v1779 = vrcp.pop %v1773
        %v1780 = vmul.f32 1.0, %v1779
        %v1781 = vrcp.pop %v1774
        %v1782 = vmul.f32 1.0, %v1781
        %v1783 = vrcp.pop %v1775
        %v1784 = vmul.f32 1.0, %v1783
        %v1785 = vrcp.pop %v1776
        %v1786 = vmul.f32 1.0, %v1785
        %v1787 = vrcp.pop %v1777
        %v1788 = vmul.f32 1.0, %v1787
        %v1789 = vrcp.pop %v1778
        %v1790 = vmul.f32 1.0, %v1789
        %v1791 = vtanh.pop %v1750
        %v1792 = vtanh.pop %v1754
        %v1793 = vmul.f32 %v1782, %v1641
        %v1794 = vmul.f32 %v1788, %v1642
        %v1795 = vmul.f32 %v1780, %v1791
        %v1796 = vmul.f32 %v1786, %v1792
        %v1797 = vadd.f32 %v1793, %v1795
        %v1798 = vadd.f32 %v1794, %v1796
        %v1799 = vtanh.pop %v1797
        %v1800 = vtanh.pop %v1798
        %v1801 = vmul.f32 %v1784, %v1799
        %v1802 = vmul.f32 %v1790, %v1800
        %v1803 = vpack.c.bf16 %v1802, %v1801
        %s1804 = scalar_lea.vmem [#allocation2], 32
        %1805 = vst [vmem:[%s1804] sm:$0xff] %v1803
        %s1806 = smul.u32 10, 4
        %s1807 = smul.addr %s1806, 8
        %s1808 = scalar_lea.vmem [#allocation3], %s1807
        %v1809 = vld [vmem:[%s1808] sm:$0xff]
        %v1810 = vld [vmem:[%s1808 + $0x8] sm:$0xff]
        %v1811 = vld [vmem:[%s1808 + $0x10] sm:$0xff]
        %v1812 = vld [vmem:[%s1808 + $0x18] sm:$0xff]
        %v1813 = vld [vmem:[%s1808 + $0x20] sm:$0xff]
        %v1814 = vld [vmem:[%s1808 + $0x28] sm:$0xff]
        %v1815 = vld [vmem:[%s1808 + $0x30] sm:$0xff]
        %v1816 = vld [vmem:[%s1808 + $0x38] sm:$0xff]
        %1817 = vmatprep.subr.bf16.mxu0 %v975
        %1818 = vmatpush1.bf16.msra.mxu0 %v974
        %1819 = vmatprep.subr.bf16.mxu0 %v979
        %1820 = vmatpush1.bf16.msra.mxu0 %v978
        %1821 = vmatprep.subr.bf16.mxu0 %v983
        %1822 = vmatpush1.bf16.msra.mxu0 %v982
        %1823 = vmatprep.subr.bf16.mxu0 %v987
        %1824 = vmatpush1.bf16.msra.mxu0 %v986
        %1825 = vmatprep.subr.bf16.mxu0 %v991
        %1826 = vmatpush1.bf16.msra.mxu0 %v990
        %1827 = vmatprep.subr.bf16.mxu0 %v995
        %1828 = vmatpush1.bf16.msra.mxu0 %v994
        %1829 = vmatprep.subr.bf16.mxu0 %v999
        %1830 = vmatpush1.bf16.msra.mxu0 %v998
        %1831 = vmatprep.subr.bf16.mxu0 %v1003
        %1832 = vmatpush1.bf16.msra.mxu0 %v1002
        %1833 = vmatprep.subr.bf16.mxu0 0
        %1834 = vmatpush1.bf16.msra.mxu0 0
        %1835 = vmatprep.subr.bf16.mxu0 0
        %1836 = vmatpush1.bf16.msra.mxu0 0
        %1837 = vmatprep.subr.bf16.mxu0 0
        %1838 = vmatpush1.bf16.msra.mxu0 0
        %1839 = vmatprep.subr.bf16.mxu0 0
        %1840 = vmatpush1.bf16.msra.mxu0 0
        %1841 = vmatprep.subr.bf16.mxu0 0
        %1842 = vmatpush1.bf16.msra.mxu0 0
        %1843 = vmatprep.subr.bf16.mxu0 0
        %1844 = vmatpush1.bf16.msra.mxu0 0
        %1845 = vmatprep.subr.bf16.mxu0 0
        %1846 = vmatpush1.bf16.msra.mxu0 0
        %1847 = vmatprep.subr.bf16.mxu0 0
        %1848 = vmatpush1.bf16.msra.mxu0 0
        %1849 = vmatprep.mubr.bf16.mxu0 0
        %1850 = vmatmul.mubr.bf16.gmra.mrb[0].mxu0 %v1803
        %v1851 = vpop.f32.mrb[0].mxu0
        %v1852 = vadd.f32 0.0, %v1851
        %v1853 = vpop.f32.mrb[0].mxu0
        %v1854 = vadd.f32 0.0, %v1853
        %v1855 = vpop.f32.mrb[0].mxu0
        %v1856 = vadd.f32 0.0, %v1855
        %v1857 = vpop.f32.mrb[0].mxu0
        %v1858 = vadd.f32 0.0, %v1857
        %1859 = vdwg.mxu0
        %1860 = vmatprep.subr.bf16.mxu0 %v977
        %1861 = vmatpush1.bf16.msra.mxu0 %v976
        %1862 = vmatprep.subr.bf16.mxu0 %v981
        %1863 = vmatpush1.bf16.msra.mxu0 %v980
        %1864 = vmatprep.subr.bf16.mxu0 %v985
        %1865 = vmatpush1.bf16.msra.mxu0 %v984
        %1866 = vmatprep.subr.bf16.mxu0 %v989
        %1867 = vmatpush1.bf16.msra.mxu0 %v988
        %1868 = vmatprep.subr.bf16.mxu0 %v993
        %1869 = vmatpush1.bf16.msra.mxu0 %v992
        %1870 = vmatprep.subr.bf16.mxu0 %v997
        %1871 = vmatpush1.bf16.msra.mxu0 %v996
        %1872 = vmatprep.subr.bf16.mxu0 %v1001
        %1873 = vmatpush1.bf16.msra.mxu0 %v1000
        %1874 = vmatprep.subr.bf16.mxu0 %v1005
        %1875 = vmatpush1.bf16.msra.mxu0 %v1004
        %1876 = vmatprep.subr.bf16.mxu0 0
        %1877 = vmatpush1.bf16.msra.mxu0 0
        %1878 = vmatprep.subr.bf16.mxu0 0
        %1879 = vmatpush1.bf16.msra.mxu0 0
        %1880 = vmatprep.subr.bf16.mxu0 0
        %1881 = vmatpush1.bf16.msra.mxu0 0
        %1882 = vmatprep.subr.bf16.mxu0 0
        %1883 = vmatpush1.bf16.msra.mxu0 0
        %1884 = vmatprep.subr.bf16.mxu0 0
        %1885 = vmatpush1.bf16.msra.mxu0 0
        %1886 = vmatprep.subr.bf16.mxu0 0
        %1887 = vmatpush1.bf16.msra.mxu0 0
        %1888 = vmatprep.subr.bf16.mxu0 0
        %1889 = vmatpush1.bf16.msra.mxu0 0
        %1890 = vmatprep.subr.bf16.mxu0 0
        %1891 = vmatpush1.bf16.msra.mxu0 0
        %1892 = vmatprep.mubr.bf16.mxu0 0
        %1893 = vmatmul.mubr.bf16.gmra.mrb[0].mxu0 %v1803
        %v1894 = vpop.f32.mrb[0].mxu0
        %v1895 = vadd.f32 0.0, %v1894
        %v1896 = vpop.f32.mrb[0].mxu0
        %v1897 = vadd.f32 0.0, %v1896
        %v1898 = vpop.f32.mrb[0].mxu0
        %v1899 = vadd.f32 0.0, %v1898
        %v1900 = vpop.f32.mrb[0].mxu0
        %v1901 = vadd.f32 0.0, %v1900
        %1902 = vdwg.mxu0
        %v1903 = vadd.f32 %v1809, %v1852
        %v1904 = vadd.f32 %v1810, %v1854
        %v1905 = vadd.f32 %v1811, %v1895
        %v1906 = vadd.f32 %v1812, %v1897
        %v1907 = vadd.f32 %v1813, %v1856
        %v1908 = vadd.f32 %v1814, %v1858
        %v1909 = vadd.f32 %v1815, %v1899
        %v1910 = vadd.f32 %v1816, %v1901
        %v1911 = vxor.u32 %v1903, 2147483648
        %v1912 = vxor.u32 %v1904, 2147483648
        %v1913 = vxor.u32 %v1905, 2147483648
        %v1914 = vxor.u32 %v1907, 2147483648
        %v1915 = vxor.u32 %v1908, 2147483648
        %v1916 = vxor.u32 %v1909, 2147483648
        %v1917 = vmul.f32 %v1911, 1.442695
        %v1918 = vpow.pop %v1917
        %v1919 = vmul.f32 %v1912, 1.442695
        %v1920 = vpow.pop %v1919
        %v1921 = vmul.f32 %v1913, 1.442695
        %v1922 = vpow.pop %v1921
        %v1923 = vmul.f32 %v1914, 1.442695
        %v1924 = vpow.pop %v1923
        %v1925 = vmul.f32 %v1915, 1.442695
        %v1926 = vpow.pop %v1925
        %v1927 = vmul.f32 %v1916, 1.442695
        %v1928 = vpow.pop %v1927
        %v1929 = vadd.f32 %v1918, 1.0
        %v1930 = vadd.f32 %v1920, 1.0
        %v1931 = vadd.f32 %v1922, 1.0
        %v1932 = vadd.f32 %v1924, 1.0
        %v1933 = vadd.f32 %v1926, 1.0
        %v1934 = vadd.f32 %v1928, 1.0
        %v1935 = vrcp.pop %v1929
        %v1936 = vmul.f32 1.0, %v1935
        %v1937 = vrcp.pop %v1930
        %v1938 = vmul.f32 1.0, %v1937
        %v1939 = vrcp.pop %v1931
        %v1940 = vmul.f32 1.0, %v1939
        %v1941 = vrcp.pop %v1932
        %v1942 = vmul.f32 1.0, %v1941
        %v1943 = vrcp.pop %v1933
        %v1944 = vmul.f32 1.0, %v1943
        %v1945 = vrcp.pop %v1934
        %v1946 = vmul.f32 1.0, %v1945
        %v1947 = vtanh.pop %v1906
        %v1948 = vtanh.pop %v1910
        %v1949 = vmul.f32 %v1938, %v1797
        %v1950 = vmul.f32 %v1944, %v1798
        %v1951 = vmul.f32 %v1936, %v1947
        %v1952 = vmul.f32 %v1942, %v1948
        %v1953 = vadd.f32 %v1949, %v1951
        %v1954 = vadd.f32 %v1950, %v1952
        %v1955 = vtanh.pop %v1953
        %v1956 = vtanh.pop %v1954
        %v1957 = vmul.f32 %v1940, %v1955
        %v1958 = vmul.f32 %v1946, %v1956
        %v1959 = vpack.c.bf16 %v1958, %v1957
        %s1960 = scalar_lea.vmem [#allocation2], 40
        %1961 = vst [vmem:[%s1960] sm:$0xff] %v1959
        %s1962 = smul.u32 12, 4
        %s1963 = smul.addr %s1962, 8
        %s1964 = scalar_lea.vmem [#allocation3], %s1963
        %v1965 = vld [vmem:[%s1964] sm:$0xff]
        %v1966 = vld [vmem:[%s1964 + $0x8] sm:$0xff]
        %v1967 = vld [vmem:[%s1964 + $0x10] sm:$0xff]
        %v1968 = vld [vmem:[%s1964 + $0x18] sm:$0xff]
        %v1969 = vld [vmem:[%s1964 + $0x20] sm:$0xff]
        %v1970 = vld [vmem:[%s1964 + $0x28] sm:$0xff]
        %v1971 = vld [vmem:[%s1964 + $0x30] sm:$0xff]
        %v1972 = vld [vmem:[%s1964 + $0x38] sm:$0xff]
        %1973 = vmatprep.subr.bf16.mxu0 %v975
        %1974 = vmatpush1.bf16.msra.mxu0 %v974
        %1975 = vmatprep.subr.bf16.mxu0 %v979
        %1976 = vmatpush1.bf16.msra.mxu0 %v978
        %1977 = vmatprep.subr.bf16.mxu0 %v983
        %1978 = vmatpush1.bf16.msra.mxu0 %v982
        %1979 = vmatprep.subr.bf16.mxu0 %v987
        %1980 = vmatpush1.bf16.msra.mxu0 %v986
        %1981 = vmatprep.subr.bf16.mxu0 %v991
        %1982 = vmatpush1.bf16.msra.mxu0 %v990
        %1983 = vmatprep.subr.bf16.mxu0 %v995
        %1984 = vmatpush1.bf16.msra.mxu0 %v994
        %1985 = vmatprep.subr.bf16.mxu0 %v999
        %1986 = vmatpush1.bf16.msra.mxu0 %v998
        %1987 = vmatprep.subr.bf16.mxu0 %v1003
        %1988 = vmatpush1.bf16.msra.mxu0 %v1002
        %1989 = vmatprep.subr.bf16.mxu0 0
        %1990 = vmatpush1.bf16.msra.mxu0 0
        %1991 = vmatprep.subr.bf16.mxu0 0
        %1992 = vmatpush1.bf16.msra.mxu0 0
        %1993 = vmatprep.subr.bf16.mxu0 0
        %1994 = vmatpush1.bf16.msra.mxu0 0
        %1995 = vmatprep.subr.bf16.mxu0 0
        %1996 = vmatpush1.bf16.msra.mxu0 0
        %1997 = vmatprep.subr.bf16.mxu0 0
        %1998 = vmatpush1.bf16.msra.mxu0 0
        %1999 = vmatprep.subr.bf16.mxu0 0
        %2000 = vmatpush1.bf16.msra.mxu0 0
        %2001 = vmatprep.subr.bf16.mxu0 0
        %2002 = vmatpush1.bf16.msra.mxu0 0
        %2003 = vmatprep.subr.bf16.mxu0 0
        %2004 = vmatpush1.bf16.msra.mxu0 0
        %2005 = vmatprep.mubr.bf16.mxu0 0
        %2006 = vmatmul.mubr.bf16.gmra.mrb[0].mxu0 %v1959
        %v2007 = vpop.f32.mrb[0].mxu0
        %v2008 = vadd.f32 0.0, %v2007
        %v2009 = vpop.f32.mrb[0].mxu0
        %v2010 = vadd.f32 0.0, %v2009
        %v2011 = vpop.f32.mrb[0].mxu0
        %v2012 = vadd.f32 0.0, %v2011
        %v2013 = vpop.f32.mrb[0].mxu0
        %v2014 = vadd.f32 0.0, %v2013
        %2015 = vdwg.mxu0
        %2016 = vmatprep.subr.bf16.mxu0 %v977
        %2017 = vmatpush1.bf16.msra.mxu0 %v976
        %2018 = vmatprep.subr.bf16.mxu0 %v981
        %2019 = vmatpush1.bf16.msra.mxu0 %v980
        %2020 = vmatprep.subr.bf16.mxu0 %v985
        %2021 = vmatpush1.bf16.msra.mxu0 %v984
        %2022 = vmatprep.subr.bf16.mxu0 %v989
        %2023 = vmatpush1.bf16.msra.mxu0 %v988
        %2024 = vmatprep.subr.bf16.mxu0 %v993
        %2025 = vmatpush1.bf16.msra.mxu0 %v992
        %2026 = vmatprep.subr.bf16.mxu0 %v997
        %2027 = vmatpush1.bf16.msra.mxu0 %v996
        %2028 = vmatprep.subr.bf16.mxu0 %v1001
        %2029 = vmatpush1.bf16.msra.mxu0 %v1000
        %2030 = vmatprep.subr.bf16.mxu0 %v1005
        %2031 = vmatpush1.bf16.msra.mxu0 %v1004
        %2032 = vmatprep.subr.bf16.mxu0 0
        %2033 = vmatpush1.bf16.msra.mxu0 0
        %2034 = vmatprep.subr.bf16.mxu0 0
        %2035 = vmatpush1.bf16.msra.mxu0 0
        %2036 = vmatprep.subr.bf16.mxu0 0
        %2037 = vmatpush1.bf16.msra.mxu0 0
        %2038 = vmatprep.subr.bf16.mxu0 0
        %2039 = vmatpush1.bf16.msra.mxu0 0
        %2040 = vmatprep.subr.bf16.mxu0 0
        %2041 = vmatpush1.bf16.msra.mxu0 0
        %2042 = vmatprep.subr.bf16.mxu0 0
        %2043 = vmatpush1.bf16.msra.mxu0 0
        %2044 = vmatprep.subr.bf16.mxu0 0
        %2045 = vmatpush1.bf16.msra.mxu0 0
        %2046 = vmatprep.subr.bf16.mxu0 0
        %2047 = vmatpush1.bf16.msra.mxu0 0
        %2048 = vmatprep.mubr.bf16.mxu0 0
        %2049 = vmatmul.mubr.bf16.gmra.mrb[0].mxu0 %v1959
        %v2050 = vpop.f32.mrb[0].mxu0
        %v2051 = vadd.f32 0.0, %v2050
        %v2052 = vpop.f32.mrb[0].mxu0
        %v2053 = vadd.f32 0.0, %v2052
        %v2054 = vpop.f32.mrb[0].mxu0
        %v2055 = vadd.f32 0.0, %v2054
        %v2056 = vpop.f32.mrb[0].mxu0
        %v2057 = vadd.f32 0.0, %v2056
        %2058 = vdwg.mxu0
        %v2059 = vadd.f32 %v1965, %v2008
        %v2060 = vadd.f32 %v1966, %v2010
        %v2061 = vadd.f32 %v1967, %v2051
        %v2062 = vadd.f32 %v1968, %v2053
        %v2063 = vadd.f32 %v1969, %v2012
        %v2064 = vadd.f32 %v1970, %v2014
        %v2065 = vadd.f32 %v1971, %v2055
        %v2066 = vadd.f32 %v1972, %v2057
        %v2067 = vxor.u32 %v2059, 2147483648
        %v2068 = vxor.u32 %v2060, 2147483648
        %v2069 = vxor.u32 %v2061, 2147483648
        %v2070 = vxor.u32 %v2063, 2147483648
        %v2071 = vxor.u32 %v2064, 2147483648
        %v2072 = vxor.u32 %v2065, 2147483648
        %v2073 = vmul.f32 %v2067, 1.442695
        %v2074 = vpow.pop %v2073
        %v2075 = vmul.f32 %v2068, 1.442695
        %v2076 = vpow.pop %v2075
        %v2077 = vmul.f32 %v2069, 1.442695
        %v2078 = vpow.pop %v2077
        %v2079 = vmul.f32 %v2070, 1.442695
        %v2080 = vpow.pop %v2079
        %v2081 = vmul.f32 %v2071, 1.442695
        %v2082 = vpow.pop %v2081
        %v2083 = vmul.f32 %v2072, 1.442695
        %v2084 = vpow.pop %v2083
        %v2085 = vadd.f32 %v2074, 1.0
        %v2086 = vadd.f32 %v2076, 1.0
        %v2087 = vadd.f32 %v2078, 1.0
        %v2088 = vadd.f32 %v2080, 1.0
        %v2089 = vadd.f32 %v2082, 1.0
        %v2090 = vadd.f32 %v2084, 1.0
        %v2091 = vrcp.pop %v2085
        %v2092 = vmul.f32 1.0, %v2091
        %v2093 = vrcp.pop %v2086
        %v2094 = vmul.f32 1.0, %v2093
        %v2095 = vrcp.pop %v2087
        %v2096 = vmul.f32 1.0, %v2095
        %v2097 = vrcp.pop %v2088
        %v2098 = vmul.f32 1.0, %v2097
        %v2099 = vrcp.pop %v2089
        %v2100 = vmul.f32 1.0, %v2099
        %v2101 = vrcp.pop %v2090
        %v2102 = vmul.f32 1.0, %v2101
        %v2103 = vtanh.pop %v2062
        %v2104 = vtanh.pop %v2066
        %v2105 = vmul.f32 %v2094, %v1953
        %v2106 = vmul.f32 %v2100, %v1954
        %v2107 = vmul.f32 %v2092, %v2103
        %v2108 = vmul.f32 %v2098, %v2104
        %v2109 = vadd.f32 %v2105, %v2107
        %v2110 = vadd.f32 %v2106, %v2108
        %v2111 = vtanh.pop %v2109
        %v2112 = vtanh.pop %v2110
        %v2113 = vmul.f32 %v2096, %v2111
        %v2114 = vmul.f32 %v2102, %v2112
        %v2115 = vpack.c.bf16 %v2114, %v2113
        %s2116 = scalar_lea.vmem [#allocation2], 48
        %2117 = vst [vmem:[%s2116] sm:$0xff] %v2115
        %s2118 = smul.u32 14, 4
        %s2119 = smul.addr %s2118, 8
        %s2120 = scalar_lea.vmem [#allocation3], %s2119
        %v2121 = vld [vmem:[%s2120] sm:$0xff]
        %v2122 = vld [vmem:[%s2120 + $0x8] sm:$0xff]
        %v2123 = vld [vmem:[%s2120 + $0x10] sm:$0xff]
        %v2124 = vld [vmem:[%s2120 + $0x18] sm:$0xff]
        %v2125 = vld [vmem:[%s2120 + $0x20] sm:$0xff]
        %v2126 = vld [vmem:[%s2120 + $0x28] sm:$0xff]
        %v2127 = vld [vmem:[%s2120 + $0x30] sm:$0xff]
        %v2128 = vld [vmem:[%s2120 + $0x38] sm:$0xff]
        %2129 = vmatprep.subr.bf16.mxu0 %v975
        %2130 = vmatpush1.bf16.msra.mxu0 %v974
        %2131 = vmatprep.subr.bf16.mxu0 %v979
        %2132 = vmatpush1.bf16.msra.mxu0 %v978
        %2133 = vmatprep.subr.bf16.mxu0 %v983
        %2134 = vmatpush1.bf16.msra.mxu0 %v982
        %2135 = vmatprep.subr.bf16.mxu0 %v987
        %2136 = vmatpush1.bf16.msra.mxu0 %v986
        %2137 = vmatprep.subr.bf16.mxu0 %v991
        %2138 = vmatpush1.bf16.msra.mxu0 %v990
        %2139 = vmatprep.subr.bf16.mxu0 %v995
        %2140 = vmatpush1.bf16.msra.mxu0 %v994
        %2141 = vmatprep.subr.bf16.mxu0 %v999
        %2142 = vmatpush1.bf16.msra.mxu0 %v998
        %2143 = vmatprep.subr.bf16.mxu0 %v1003
        %2144 = vmatpush1.bf16.msra.mxu0 %v1002
        %2145 = vmatprep.subr.bf16.mxu0 0
        %2146 = vmatpush1.bf16.msra.mxu0 0
        %2147 = vmatprep.subr.bf16.mxu0 0
        %2148 = vmatpush1.bf16.msra.mxu0 0
        %2149 = vmatprep.subr.bf16.mxu0 0
        %2150 = vmatpush1.bf16.msra.mxu0 0
        %2151 = vmatprep.subr.bf16.mxu0 0
        %2152 = vmatpush1.bf16.msra.mxu0 0
        %2153 = vmatprep.subr.bf16.mxu0 0
        %2154 = vmatpush1.bf16.msra.mxu0 0
        %2155 = vmatprep.subr.bf16.mxu0 0
        %2156 = vmatpush1.bf16.msra.mxu0 0
        %2157 = vmatprep.subr.bf16.mxu0 0
        %2158 = vmatpush1.bf16.msra.mxu0 0
        %2159 = vmatprep.subr.bf16.mxu0 0
        %2160 = vmatpush1.bf16.msra.mxu0 0
        %2161 = vmatprep.mubr.bf16.mxu0 0
        %2162 = vmatmul.mubr.bf16.gmra.mrb[0].mxu0 %v2115
        %v2163 = vpop.f32.mrb[0].mxu0
        %v2164 = vadd.f32 0.0, %v2163
        %v2165 = vpop.f32.mrb[0].mxu0
        %v2166 = vadd.f32 0.0, %v2165
        %v2167 = vpop.f32.mrb[0].mxu0
        %v2168 = vadd.f32 0.0, %v2167
        %v2169 = vpop.f32.mrb[0].mxu0
        %v2170 = vadd.f32 0.0, %v2169
        %2171 = vdwg.mxu0
        %2172 = vmatprep.subr.bf16.mxu0 %v977
        %2173 = vmatpush1.bf16.msra.mxu0 %v976
        %2174 = vmatprep.subr.bf16.mxu0 %v981
        %2175 = vmatpush1.bf16.msra.mxu0 %v980
        %2176 = vmatprep.subr.bf16.mxu0 %v985
        %2177 = vmatpush1.bf16.msra.mxu0 %v984
        %2178 = vmatprep.subr.bf16.mxu0 %v989
        %2179 = vmatpush1.bf16.msra.mxu0 %v988
        %2180 = vmatprep.subr.bf16.mxu0 %v993
        %2181 = vmatpush1.bf16.msra.mxu0 %v992
        %2182 = vmatprep.subr.bf16.mxu0 %v997
        %2183 = vmatpush1.bf16.msra.mxu0 %v996
        %2184 = vmatprep.subr.bf16.mxu0 %v1001
        %2185 = vmatpush1.bf16.msra.mxu0 %v1000
        %2186 = vmatprep.subr.bf16.mxu0 %v1005
        %2187 = vmatpush1.bf16.msra.mxu0 %v1004
        %2188 = vmatprep.subr.bf16.mxu0 0
        %2189 = vmatpush1.bf16.msra.mxu0 0
        %2190 = vmatprep.subr.bf16.mxu0 0
        %2191 = vmatpush1.bf16.msra.mxu0 0
        %2192 = vmatprep.subr.bf16.mxu0 0
        %2193 = vmatpush1.bf16.msra.mxu0 0
        %2194 = vmatprep.subr.bf16.mxu0 0
        %2195 = vmatpush1.bf16.msra.mxu0 0
        %2196 = vmatprep.subr.bf16.mxu0 0
        %2197 = vmatpush1.bf16.msra.mxu0 0
        %2198 = vmatprep.subr.bf16.mxu0 0
        %2199 = vmatpush1.bf16.msra.mxu0 0
        %2200 = vmatprep.subr.bf16.mxu0 0
        %2201 = vmatpush1.bf16.msra.mxu0 0
        %2202 = vmatprep.subr.bf16.mxu0 0
        %2203 = vmatpush1.bf16.msra.mxu0 0
        %2204 = vmatprep.mubr.bf16.mxu0 0
        %2205 = vmatmul.mubr.bf16.gmra.mrb[0].mxu0 %v2115
        %v2206 = vpop.f32.mrb[0].mxu0
        %v2207 = vadd.f32 0.0, %v2206
        %v2208 = vpop.f32.mrb[0].mxu0
        %v2209 = vadd.f32 0.0, %v2208
        %v2210 = vpop.f32.mrb[0].mxu0
        %v2211 = vadd.f32 0.0, %v2210
        %v2212 = vpop.f32.mrb[0].mxu0
        %v2213 = vadd.f32 0.0, %v2212
        %2214 = vdwg.mxu0
        %v2215 = vadd.f32 %v2121, %v2164
        %v2216 = vadd.f32 %v2122, %v2166
        %v2217 = vadd.f32 %v2123, %v2207
        %v2218 = vadd.f32 %v2124, %v2209
        %v2219 = vadd.f32 %v2125, %v2168
        %v2220 = vadd.f32 %v2126, %v2170
        %v2221 = vadd.f32 %v2127, %v2211
        %v2222 = vadd.f32 %v2128, %v2213
        %v2223 = vxor.u32 %v2215, 2147483648
        %v2224 = vxor.u32 %v2216, 2147483648
        %v2225 = vxor.u32 %v2217, 2147483648
        %v2226 = vxor.u32 %v2219, 2147483648
        %v2227 = vxor.u32 %v2220, 2147483648
        %v2228 = vxor.u32 %v2221, 2147483648
        %v2229 = vmul.f32 %v2223, 1.442695
        %v2230 = vpow.pop %v2229
        %v2231 = vmul.f32 %v2224, 1.442695
        %v2232 = vpow.pop %v2231
        %v2233 = vmul.f32 %v2225, 1.442695
        %v2234 = vpow.pop %v2233
        %v2235 = vmul.f32 %v2226, 1.442695
        %v2236 = vpow.pop %v2235
        %v2237 = vmul.f32 %v2227, 1.442695
        %v2238 = vpow.pop %v2237
        %v2239 = vmul.f32 %v2228, 1.442695
        %v2240 = vpow.pop %v2239
        %v2241 = vadd.f32 %v2230, 1.0
        %v2242 = vadd.f32 %v2232, 1.0
        %v2243 = vadd.f32 %v2234, 1.0
        %v2244 = vadd.f32 %v2236, 1.0
        %v2245 = vadd.f32 %v2238, 1.0
        %v2246 = vadd.f32 %v2240, 1.0
        %v2247 = vrcp.pop %v2241
        %v2248 = vmul.f32 1.0, %v2247
        %v2249 = vrcp.pop %v2242
        %v2250 = vmul.f32 1.0, %v2249
        %v2251 = vrcp.pop %v2243
        %v2252 = vmul.f32 1.0, %v2251
        %v2253 = vrcp.pop %v2244
        %v2254 = vmul.f32 1.0, %v2253
        %v2255 = vrcp.pop %v2245
        %v2256 = vmul.f32 1.0, %v2255
        %v2257 = vrcp.pop %v2246
        %v2258 = vmul.f32 1.0, %v2257
        %v2259 = vtanh.pop %v2218
        %v2260 = vtanh.pop %v2222
        %v2261 = vmul.f32 %v2250, %v2109
        %v2262 = vmul.f32 %v2256, %v2110
        %v2263 = vmul.f32 %v2248, %v2259
        %v2264 = vmul.f32 %v2254, %v2260
        %v2265 = vadd.f32 %v2261, %v2263
        %v2266 = vadd.f32 %v2262, %v2264
        %v2267 = vtanh.pop %v2265
        %v2268 = vtanh.pop %v2266
        %v2269 = vmul.f32 %v2252, %v2267
        %v2270 = vmul.f32 %v2258, %v2268
        %v2271 = vpack.c.bf16 %v2270, %v2269
        %s2272 = scalar_lea.vmem [#allocation2], 56
        %2273 = vst [vmem:[%s2272] sm:$0xff] %v2271
        %p2274 = scmp.eq.s32.totalorder %s24, 1
        // Predicated region
        $region61: #{tpu_custom_call.1} parent=39 // pred_check
          %p2275 = pneg %p2274
        $region62: #{tpu_custom_call.1} parent=39 // pred_check_branch
          %2277 = sbr.rel (%p2275) target = $region64
        $region63: #{tpu_custom_call.1} parent=39 // pred_region
          %v2278 = vld [vmem:[#allocation10] sm:$0xff]
          %v2279 = vld [vmem:[#allocation10 + $0x8] sm:$0xff]
          %v2280 = vld [vmem:[#allocation10 + $0x10] sm:$0xff]
          %v2281 = vld [vmem:[#allocation10 + $0x18] sm:$0xff]
          %v2282 = vld [vmem:[#allocation10 + $0x20] sm:$0xff]
          %v2283 = vld [vmem:[#allocation10 + $0x28] sm:$0xff]
          %v2284 = vld [vmem:[#allocation10 + $0x30] sm:$0xff]
          %v2285 = vld [vmem:[#allocation10 + $0x38] sm:$0xff]
          %v2286 = vld [vmem:[#allocation10 + $0x40] sm:$0xff]
          %v2287 = vld [vmem:[#allocation10 + $0x48] sm:$0xff]
          %v2288 = vld [vmem:[#allocation10 + $0x50] sm:$0xff]
          %v2289 = vld [vmem:[#allocation10 + $0x58] sm:$0xff]
          %v2290 = vld [vmem:[#allocation10 + $0x60] sm:$0xff]
          %v2291 = vld [vmem:[#allocation10 + $0x68] sm:$0xff]
          %v2292 = vld [vmem:[#allocation10 + $0x70] sm:$0xff]
          %v2293 = vld [vmem:[#allocation10 + $0x78] sm:$0xff]
          %v2294 = vld [vmem:[%s5] sm:$0x1]
          %v2296 = vlaneseq
          %v2297 = vshrl.u32 %v2296, 7
          %v2298 = vsub.s32 0, %v2297
          %v2299 = vrot.slane %v2294, %v2298
          %2301 = vmatprep.subr.mxu0 0.0
          %2302 = vmatpush1.msra.mxu0 %v2278
          %2303 = vmatprep.subr.mxu0 0.0
          %2304 = vmatpush1.msra.mxu0 %v2279
          %2305 = vmatprep.subr.mxu0 0.0
          %2306 = vmatpush1.msra.mxu0 %v2280
          %2307 = vmatprep.subr.mxu0 0.0
          %2308 = vmatpush1.msra.mxu0 %v2281
          %2309 = vmatprep.subr.mxu0 0.0
          %2310 = vmatpush1.msra.mxu0 %v2282
          %2311 = vmatprep.subr.mxu0 0.0
          %2312 = vmatpush1.msra.mxu0 %v2283
          %2313 = vmatprep.subr.mxu0 0.0
          %2314 = vmatpush1.msra.mxu0 %v2284
          %2315 = vmatprep.subr.mxu0 0.0
          %2316 = vmatpush1.msra.mxu0 %v2285
          %2317 = vmatprep.subr.mxu0 0.0
          %2318 = vmatpush1.msra.mxu0 %v2286
          %2319 = vmatprep.subr.mxu0 0.0
          %2320 = vmatpush1.msra.mxu0 %v2287
          %2321 = vmatprep.subr.mxu0 0.0
          %2322 = vmatpush1.msra.mxu0 %v2288
          %2323 = vmatprep.subr.mxu0 0.0
          %2324 = vmatpush1.msra.mxu0 %v2289
          %2325 = vmatprep.subr.mxu0 0.0
          %2326 = vmatpush1.msra.mxu0 %v2290
          %2327 = vmatprep.subr.mxu0 0.0
          %2328 = vmatpush1.msra.mxu0 %v2291
          %2329 = vmatprep.subr.mxu0 0.0
          %2330 = vmatpush1.msra.mxu0 %v2292
          %2331 = vmatprep.subr.mxu0 0.0
          %2332 = vmatpush1.msra.mxu0 %v2293
          %2333 = vmatprep.subr.mxu0 0.0
          %2334 = vmatpush1.msra.mxu0 0.0
          %2335 = vmatprep.subr.mxu0 0.0
          %2336 = vmatpush1.msra.mxu0 0.0
          %2337 = vmatprep.subr.mxu0 0.0
          %2338 = vmatpush1.msra.mxu0 0.0
          %2339 = vmatprep.subr.mxu0 0.0
          %2340 = vmatpush1.msra.mxu0 0.0
          %2341 = vmatprep.subr.mxu0 0.0
          %2342 = vmatpush1.msra.mxu0 0.0
          %2343 = vmatprep.subr.mxu0 0.0
          %2344 = vmatpush1.msra.mxu0 0.0
          %2345 = vmatprep.subr.mxu0 0.0
          %2346 = vmatpush1.msra.mxu0 0.0
          %2347 = vmatprep.subr.mxu0 0.0
          %2348 = vmatpush1.msra.mxu0 0.0
          %2349 = vmatprep.subr.mxu0 0.0
          %2350 = vmatpush1.msra.mxu0 0.0
          %2351 = vmatprep.subr.mxu0 0.0
          %2352 = vmatpush1.msra.mxu0 0.0
          %2353 = vmatprep.subr.mxu0 0.0
          %2354 = vmatpush1.msra.mxu0 0.0
          %2355 = vmatprep.subr.mxu0 0.0
          %2356 = vmatpush1.msra.mxu0 0.0
          %2357 = vmatprep.subr.mxu0 0.0
          %2358 = vmatpush1.msra.mxu0 0.0
          %2359 = vmatprep.subr.mxu0 0.0
          %2360 = vmatpush1.msra.mxu0 0.0
          %2361 = vmatprep.subr.mxu0 0.0
          %2362 = vmatpush1.msra.mxu0 0.0
          %2363 = vmatprep.subr.mxu0 0.0
          %2364 = vmatpush1.msra.mxu0 0.0
          %2365 = vmatprep.mubr.f32.mxu0 0.0
          %2366 = vmatmul.mubr.f32.gmra.mrb[0].mxu0 %v2269
          %v2367 = vpop.f32.mrb[0].mxu0
          %v2368 = vadd.f32 %v2299, %v2367
          %v2369 = vpop.f32.mrb[0].mxu0
          %2370 = vmatprep.mubr.f32.mxu0 0.0
          %2371 = vmatmul.mubr.f32.gmra.mrb[0].mxu0 %v2270
          %v2372 = vpop.f32.mrb[0].mxu0
          %v2373 = vadd.f32 %v2299, %v2372
          %v2374 = vpop.f32.mrb[0].mxu0
          %2375 = vdwg.mxu0
          %2376 = vst [vmem:[#allocation11] sm:$0xff] %v2368
          %2377 = vst [vmem:[#allocation11 + $0x8] sm:$0xff] %v2373
        $region64: #{tpu_custom_call.1} parent=39 // pred_fallthru
          _
        // Predicated region
        $region65: #{tpu_custom_call.1} parent=39 // pred_check
          %p2378 = pneg %p157
        $region66: #{tpu_custom_call.1} parent=39 // pred_check_branch
          %2380 = sbr.rel (%p2378) target = $region68
        $region67: #{tpu_custom_call.1} parent=39 // pred_region
          %s2382 = ssub.s32 256, 256
          %2383 = vsyncadd [#allocation7], %s2382
          %s2384 = sshll.u32 [#allocation11], 4
          %s2385 = int_to_ptr.vmem [resolvable:$true] %s2384
          %2390 = dma.vmem_to_hbm [thread:$0]  %s2385, 256, %s6, [#allocation7], 128, 128, 8
        $region68: #{tpu_custom_call.1} parent=39 // pred_fallthru
          _
        // Predicated region
        $region69: #{tpu_custom_call.1} parent=39 // pred_check
          %p2391 = pneg %p157
        $region70: #{tpu_custom_call.1} parent=39 // pred_check_branch
          %2393 = sbr.rel (%p2391) target = $region72
        $region71: #{tpu_custom_call.1} parent=39 // pred_region
          %2394 = dma.done [#allocation7], 256
        $region72: #{tpu_custom_call.1} parent=39 // pred_fallthru
          _
      $region40: #{tpu_custom_call.1} parent=5 // pred_fallthru
        _
      %p2395 = scmp.le.s32.totalorder 2, %s19
      // Predicated region
      $region73: #{tpu_custom_call.1} parent=5 // pred_check
        %p2396 = pneg %p2395
      $region74: #{tpu_custom_call.1} parent=5 // pred_check_branch
        %2398 = sbr.rel (%p2396) target = $region76
      $region75: #{tpu_custom_call.1} parent=5 // pred_region
        %s2399 = ssub.s32 %s19, 2
      $region76: #{tpu_custom_call.1} parent=5 // pred_fallthru
        _
    $region6: #{tpu_custom_call.1} parent=1 // loop_footer
      %s23 = sadd.s32 1, %s19
    $region7: #{tpu_custom_call.1} parent=1 // loop_footer_branch
      %18 = sbr.rel target = $region3
    $region8: #{tpu_custom_call.1} parent=1 // loop_exit
      _
    %2400 = vsyncpa [#allocation6], 1
    %s2401 = scalar_lea.sflag [#allocation6], 1
    %2402 = vsyncpa %s2401, 1
    %2403 = vsyncpa [#allocation9], 1
    %s2404 = scalar_lea.sflag [#allocation9], 1
    %2405 = vsyncpa %s2404, 1
    %2406 = vsyncpa [#allocation7], 1
    %s2407 = scalar_lea.sflag [#allocation7], 1
    %2408 = vsyncpa %s2407, 1
  %2409 = vsyncmov [#allocation4]
  %s2410 = vpop.sfrf %2409
  %p2411 = scmp.eq.s32.totalorder %s2410, 0
  %p2412 = pneg %p2411
  %2414 = shalt.err (%p2412)

</llo_original>
